<compile_context>
chip_gen: v6e
topology: v6e:2x2x1
jax: 0.10.0
libtpu: 0.0.40
codegen_flags: <defaults>
</compile_context>

<pallas_src>
import functools
import math

import jax
import jax.numpy as jnp
from jax.experimental import pallas as pl
from jax.experimental.pallas import tpu as pltpu

EPS = 1e-7
_VMEM_BUDGET = 8 * 1024 * 1024  # double-buffered block budget; safe on v5e/v6e/v7x defaults


def _round_up(x, m):
    return ((x + m - 1) // m) * m


def _pick_batch_tile(batch, grid_n, block_bytes_fn, vmem_budget):
    """Largest divisor of `batch` to fold into one block, subject to the VMEM budget and to
    keeping >= 2 total grid steps (feeds both v7x TensorCores) whenever there is enough work."""
    for tb in range(batch, 0, -1):
        if batch % tb:
            continue
        if 2 * block_bytes_fn(tb) > vmem_budget:
            continue
        if grid_n * (batch // tb) < 2 and grid_n * batch >= 2:
            continue
        return tb
    return 1


def _lane_tile(n, tile_n, bytes_per_col, vmem_budget):
    cols = _round_up(n, 128)
    max_cols = max(128, (vmem_budget // (2 * bytes_per_col)) // 128 * 128)
    return max(128, (min(tile_n, cols, max_cols) // 128) * 128)


# --------------------------------------------------------------------------------------
# Squash kernel (lane-dense): s_ref / out_ref are (TB, D, TN); squash over the D axis.
# Used for the Get_Abstract_Caps_Down forward, where routing reduces exactly to squash(u).
# --------------------------------------------------------------------------------------
def _squash_kernel(s_ref, out_ref):
    s = s_ref[...].astype(jnp.float32)                    # (TB, D, TN)
    sq = jnp.sum(s * s, axis=1, keepdims=True)            # (TB, 1, TN) sublane reduce
    scale = (sq / (1.0 + sq)) / jnp.sqrt(sq + EPS)        # exact; only (TB,1,TN) rows
    out_ref[...] = (s * scale).astype(out_ref.dtype)


def _squash_lane_dense(s, *, tile_n=1024, vmem_budget=_VMEM_BUDGET):
    """squash over axis 1 (D) of a lane-dense (B, D, N) array; N is the lane axis."""
    B, D, N = s.shape
    tn = _lane_tile(N, tile_n, 4 * 2 * D, vmem_budget)    # in + out f32 per column
    Np = _round_up(N, tn)
    if B == 1 and Np // tn == 1 and tn > 128:             # keep >= 2 steps for v7x megacore
        tn = max(128, (tn // 2) // 128 * 128)
        Np = _round_up(N, tn)
    if Np != N:                                           # zero-padded cols give 0 and are sliced off
        s = jnp.pad(s, ((0, 0), (0, 0), (0, Np - N)))
    grid_n = Np // tn
    block_bytes = lambda tb: 4 * tn * tb * 2 * D
    tb = _pick_batch_tile(B, grid_n, block_bytes, vmem_budget)

    out = pl.pallas_call(
        _squash_kernel,
        out_shape=jax.ShapeDtypeStruct((B, D, Np), s.dtype),
        grid_spec=pltpu.PrefetchScalarGridSpec(
            num_scalar_prefetch=0,
            grid=(grid_n, B // tb),
            in_specs=[pl.BlockSpec((tb, D, tn), lambda ni, bi: (bi, 0, ni))],
            out_specs=pl.BlockSpec((tb, D, tn), lambda ni, bi: (bi, 0, ni)),
        ),
        compiler_params=pltpu.CompilerParams(
            dimension_semantics=("parallel", "parallel")),
    )(s)
    return out[:, :, :N]


# --------------------------------------------------------------------------------------
# General agreement-routing kernel (distinct u_i), lane-dense tiles.
#   u_ref:   (TB, I, D, TN)  prediction vectors, streamed per (t, i) at the point of use
#   b_ref:   (I, TN)         routing logits (shared across batch)
#   out_ref: (TB, D, TN)     routed + squashed output capsules
# All I-axis reductions are elementwise trees over (1, TN) rows (pure VPU, no relayouts).
# --------------------------------------------------------------------------------------
def _routing_kernel(u_ref, b_ref, out_ref, *, num_iterations, batch_tile, num_in_caps):
    I = num_in_caps

    def load_u(t, i):                                     # (D, TN), loaded adjacent to its use
        return u_ref[t, i].astype(jnp.float32)

    def softmax_rows(rows):                               # softmax over the I rows, each (1, TN)
        m = rows[0]
        for r in rows[1:]:
            m = jnp.maximum(m, r)                         # elementwise VPU max over I
        e = [jnp.exp(r - m) for r in rows]                # EUP
        denom = e[0]
        for r in e[1:]:
            denom = denom + r
        inv = 1.0 / denom                                 # exact reciprocal of one (1, TN) row
        return [r * inv for r in e]

    def squash_d(s):                                      # squash over the D (sublane) axis
        sq = jnp.sum(s * s, axis=0, keepdims=True)        # (1, TN)
        return s * ((sq / (1.0 + sq)) / jnp.sqrt(sq + EPS))

    def weighted_sum(t, c_rows):                          # sum_i c_i * u_i, u streamed per-row
        s = c_rows[0] * load_u(t, 0)
        for i in range(1, I):
            s = s + c_rows[i] * load_u(t, i)
        return s                                          # (D, TN)

    b0_rows = [b_ref[pl.ds(i, 1), :].astype(jnp.float32) for i in range(I)]
    c0_rows = softmax_rows(b0_rows)                       # shared across the batch sub-tile

    for t in range(batch_tile):
        v = squash_d(weighted_sum(t, c0_rows))
        b_rows = b0_rows
        for _ in range(num_iterations):                   # static unroll
            # agreement <u_i, v>: one (1, TN) row per input capsule
            b_rows = [b_rows[i] + jnp.sum(load_u(t, i) * v, axis=0, keepdims=True)
                      for i in range(I)]
            c_rows = softmax_rows(b_rows)
            v = squash_d(weighted_sum(t, c_rows))
        out_ref[t] = v.astype(out_ref.dtype)


# --------------------------------------------------------------------------------------
# Agreement_Routing_Down wrapper: predictions (B, O, H, W, I, D), b (1, O, H, W, I_b)
# --------------------------------------------------------------------------------------
def agreement_routing_down(predictions, b_param, num_iterations, *, tile_n=512):
    B, O, H, W, I, D = predictions.shape
    N = O * H * W

    if I == 1:
        # u is shared across the input-caps axis: the softmax weights sum to 1, so every
        # routing pass yields squash(u) independent of b / num_iterations. Skip the routing
        # loop entirely and run the tiny lane-dense squash kernel (perf review).
        u = jnp.transpose(predictions.reshape(B, O, H, W, D), (0, 4, 1, 2, 3)).reshape(B, D, N)
        v = _squash_lane_dense(u)
        v = v.reshape(B, D, O, H, W)
        return jnp.transpose(v, (0, 2, 3, 4, 1))          # (B, O, H, W, D)

    # General path: lane-dense layout, row axis N = O*H*W on the 128-lane axis.
    u = jnp.transpose(predictions, (0, 4, 5, 1, 2, 3)).reshape(B, I, D, N)
    b = jnp.transpose(jnp.reshape(b_param, (O, H, W, I)), (3, 0, 1, 2)).reshape(I, N)

    tn = _lane_tile(N, tile_n, 4 * (I * D + D + I), _VMEM_BUDGET)
    Np = _round_up(N, tn)
    if B == 1 and Np // tn == 1 and tn > 128:             # keep >= 2 steps for v7x megacore
        tn = max(128, (tn // 2) // 128 * 128)
        Np = _round_up(N, tn)
    if Np != N:                                           # zero-padded cols are benign, sliced off
        u = jnp.pad(u, ((0, 0), (0, 0), (0, 0), (0, Np - N)))
        b = jnp.pad(b, ((0, 0), (0, Np - N)))
    grid_n = Np // tn
    block_bytes = lambda tb: 4 * tn * (tb * (I * D + D) + I)
    tb = _pick_batch_tile(B, grid_n, block_bytes, _VMEM_BUDGET)

    kernel = functools.partial(_routing_kernel, num_iterations=num_iterations,
                               batch_tile=tb, num_in_caps=I)

    out = pl.pallas_call(
        kernel,
        out_shape=jax.ShapeDtypeStruct((B, D, Np), predictions.dtype),
        grid_spec=pltpu.PrefetchScalarGridSpec(
            num_scalar_prefetch=0,
            # batch is the inner grid axis: b's block index is constant across consecutive
            # steps, so its DMA is skipped on revisits.
            grid=(grid_n, B // tb),
            in_specs=[
                pl.BlockSpec((tb, I, D, tn), lambda ni, bi: (bi, 0, 0, ni)),
                pl.BlockSpec((I, tn), lambda ni, bi: (0, ni)),
            ],
            out_specs=pl.BlockSpec((tb, D, tn), lambda ni, bi: (bi, 0, ni)),
        ),
        compiler_params=pltpu.CompilerParams(
            dimension_semantics=("parallel", "parallel")),
    )(u, b)

    out = out[:, :, :N].reshape(B, D, O, H, W)
    return jnp.transpose(out, (0, 2, 3, 4, 1))            # (B, O, H, W, D)


# --------------------------------------------------------------------------------------
# Full Get_Abstract_Caps_Down forward
# --------------------------------------------------------------------------------------
def _caps_conv_predictions(x, conv_w, conv_b, capsout_n_maps, capsout_n_dims, stride, padding):
    """Mirror of the PyTorch permute/reshape + Conv2d + reshape/permute stack."""
    B, in_maps, H, W, in_dims = x.shape
    x2 = jnp.transpose(x, (0, 1, 4, 2, 3)).reshape(B, in_maps * in_dims, H, W)
    # TODO(synk): the Conv2d feature extractor is delegated to XLA's conv; only the
    # agreement-routing/squash core is a hand-written Pallas kernel.
    y = jax.lax.conv_general_dilated(
        x2, conv_w,
        window_strides=(stride, stride),
        padding=((padding, padding), (padding, padding)),
        dimension_numbers=("NCHW", "OIHW", "NCHW"))
    y = y + conv_b.reshape(1, -1, 1, 1)
    _, _, Hn, Wn = y.shape
    O, D = capsout_n_maps, capsout_n_dims
    y = y.reshape(B, O, D, Hn, Wn, 1)
    return jnp.transpose(y, (0, 1, 3, 4, 5, 2))           # (B, O, Hn, Wn, 1, D)


def get_abstract_caps_down_forward(x, conv_w, conv_b, b_routing, *, capsout_n_maps,
                                   capsout_n_dims, stride, padding, num_iterations=2):
    preds = _caps_conv_predictions(x, conv_w, conv_b, capsout_n_maps, capsout_n_dims,
                                   stride, padding)
    # predictions keep their singleton input-caps axis (no I-fold broadcast materialized);
    # agreement_routing_down dispatches to the exact squash(u) fast path in that case.
    return agreement_routing_down(preds, b_routing, num_iterations)


# --------------------------------------------------------------------------------------
# Pure-JAX references (mirror the PyTorch forward)
# --------------------------------------------------------------------------------------
def _squash_ref(s, axis=-1):
    sq = jnp.sum(s * s, axis=axis, keepdims=True)
    return (sq / (1.0 + sq)) * (s / jnp.sqrt(sq + EPS))


def reference_routing(pred, b, num_iterations):
    c = jax.nn.softmax(b, axis=-1)
    v = _squash_ref(jnp.sum(c[..., None] * pred, axis=-2))
    bb = b
    for _ in range(num_iterations):
        bb = bb + jnp.sum(pred * v[..., None, :], axis=-1)
        c = jax.nn.softmax(bb, axis=-1)
        v = _squash_ref(jnp.sum(pred * c[..., None], axis=-2))
    return v


def reference_full(x, conv_w, conv_b, b_routing, *, capsout_n_maps, capsout_n_dims,
                   stride, padding, num_iterations=2):
    preds = _caps_conv_predictions(x, conv_w, conv_b, capsout_n_maps, capsout_n_dims,
                                   stride, padding)
    return reference_routing(preds, b_routing, num_iterations)


if __name__ == "__main__":
    key = jax.random.PRNGKey(0)
    k1, k2, k3, k4 = jax.random.split(key, 4)

    # ---- Test 1: general Agreement_Routing_Down kernel (distinct u_i) ----
    B, O, H, W, I, D = 2, 4, 4, 4, 8, 16
    NUM_ITERATIONS = 3
    predictions = jax.random.normal(k1, (B, O, H, W, I, D), dtype=jnp.float32)
    b_param = jnp.zeros((1, O, H, W, I), dtype=jnp.float32)   # module initializes b to zeros

    out = jax.block_until_ready(agreement_routing_down(predictions, b_param, NUM_ITERATIONS))
    ref = jax.block_until_ready(reference_routing(predictions, b_param, NUM_ITERATIONS))
    assert out.shape == (B, O, H, W, D)
    assert jnp.allclose(out, ref, atol=1e-4, rtol=1e-4), "routing kernel mismatch vs reference"

    # ---- Test 2: full Get_Abstract_Caps_Down forward (conv + routing, 2 iterations) ----
    batch, capsin_maps, capsin_dims = 2, 4, 8
    capsout_maps, capsout_dims = 4, 16
    old_h = old_w = 9
    ky = kx = 3
    stride, padding = 1, 0
    new_h = (old_h - ky + 2 * padding) // stride + 1          # 7

    x = jax.random.normal(k2, (batch, capsin_maps, old_h, old_w, capsin_dims), dtype=jnp.float32)
    fan_in = capsin_maps * capsin_dims * ky * kx
    stdv = 1.0 / math.sqrt(fan_in)
    conv_w = jax.random.uniform(
        k3, (capsout_maps * capsout_dims, capsin_maps * capsin_dims, ky, kx),
        minval=-stdv, maxval=stdv, dtype=jnp.float32)
    conv_b = jax.random.uniform(
        k4, (capsout_maps * capsout_dims,), minval=-stdv, maxval=stdv, dtype=jnp.float32)
    b_routing = jnp.zeros((1, capsout_maps, new_h, new_h, capsin_maps), dtype=jnp.float32)

    out2 = jax.block_until_ready(get_abstract_caps_down_forward(
        x, conv_w, conv_b, b_routing, capsout_n_maps=capsout_maps,
        capsout_n_dims=capsout_dims, stride=stride, padding=padding, num_iterations=2))
    ref2 = jax.block_until_ready(reference_full(
        x, conv_w, conv_b, b_routing, capsout_n_maps=capsout_maps,
        capsout_n_dims=capsout_dims, stride=stride, padding=padding, num_iterations=2))
    assert out2.shape == (batch, capsout_maps, new_h, new_h, capsout_dims)
    assert jnp.allclose(out2, ref2, atol=1e-4, rtol=1e-4), "full forward mismatch vs reference"

    print("KERNEL_OK")
</pallas_src>

<mosaic_0001>
module attributes {stable_mosaic.version = 11 : i64} {
  func.func @_routing_kernel(%arg0: i32, %arg1: i32, %arg2: memref<1x8x16x128xf32, #tpu.memory_space<vmem>>, %arg3: memref<8x128xf32, #tpu.memory_space<vmem>>, %arg4: memref<1x16x128xf32, #tpu.memory_space<vmem>>) attributes {dimension_semantics = [#tpu.dimension_semantics<parallel>, #tpu.dimension_semantics<parallel>], iteration_bounds = array<i64: 1, 2>, scalar_prefetch = 0 : i64, scratch_operands = 0 : i64, tpu.core_type = #tpu.core_type<tc>, window_params = [{transform_indices = @transform_0, window_bounds = array<i64: 1, 8, 16, 128>}, {transform_indices = @transform_1, window_bounds = array<i64: 8, 128>}, {transform_indices = @transform_2, window_bounds = array<i64: 1, 16, 128>}]} {
    %c0 = arith.constant 0 : index
    %c0_0 = arith.constant 0 : index
    %0 = vector.load %arg3[%c0, %c0_0] : memref<8x128xf32, #tpu.memory_space<vmem>>, vector<1x128xf32>
    %c1 = arith.constant 1 : index
    %c0_1 = arith.constant 0 : index
    %1 = vector.load %arg3[%c1, %c0_1] : memref<8x128xf32, #tpu.memory_space<vmem>>, vector<1x128xf32>
    %c2 = arith.constant 2 : index
    %c0_2 = arith.constant 0 : index
    %2 = vector.load %arg3[%c2, %c0_2] : memref<8x128xf32, #tpu.memory_space<vmem>>, vector<1x128xf32>
    %c3 = arith.constant 3 : index
    %c0_3 = arith.constant 0 : index
    %3 = vector.load %arg3[%c3, %c0_3] : memref<8x128xf32, #tpu.memory_space<vmem>>, vector<1x128xf32>
    %c4 = arith.constant 4 : index
    %c0_4 = arith.constant 0 : index
    %4 = vector.load %arg3[%c4, %c0_4] : memref<8x128xf32, #tpu.memory_space<vmem>>, vector<1x128xf32>
    %c5 = arith.constant 5 : index
    %c0_5 = arith.constant 0 : index
    %5 = vector.load %arg3[%c5, %c0_5] : memref<8x128xf32, #tpu.memory_space<vmem>>, vector<1x128xf32>
    %c6 = arith.constant 6 : index
    %c0_6 = arith.constant 0 : index
    %6 = vector.load %arg3[%c6, %c0_6] : memref<8x128xf32, #tpu.memory_space<vmem>>, vector<1x128xf32>
    %c7 = arith.constant 7 : index
    %c0_7 = arith.constant 0 : index
    %7 = vector.load %arg3[%c7, %c0_7] : memref<8x128xf32, #tpu.memory_space<vmem>>, vector<1x128xf32>
    %8 = arith.maximumf %0, %1 : vector<1x128xf32>
    %9 = arith.maximumf %8, %2 : vector<1x128xf32>
    %10 = arith.maximumf %9, %3 : vector<1x128xf32>
    %11 = arith.maximumf %10, %4 : vector<1x128xf32>
    %12 = arith.maximumf %11, %5 : vector<1x128xf32>
    %13 = arith.maximumf %12, %6 : vector<1x128xf32>
    %14 = arith.maximumf %13, %7 : vector<1x128xf32>
    %15 = arith.subf %0, %14 : vector<1x128xf32>
    %16 = math.exp %15 : vector<1x128xf32>
    %17 = arith.subf %1, %14 : vector<1x128xf32>
    %18 = math.exp %17 : vector<1x128xf32>
    %19 = arith.subf %2, %14 : vector<1x128xf32>
    %20 = math.exp %19 : vector<1x128xf32>
    %21 = arith.subf %3, %14 : vector<1x128xf32>
    %22 = math.exp %21 : vector<1x128xf32>
    %23 = arith.subf %4, %14 : vector<1x128xf32>
    %24 = math.exp %23 : vector<1x128xf32>
    %25 = arith.subf %5, %14 : vector<1x128xf32>
    %26 = math.exp %25 : vector<1x128xf32>
    %27 = arith.subf %6, %14 : vector<1x128xf32>
    %28 = math.exp %27 : vector<1x128xf32>
    %29 = arith.subf %7, %14 : vector<1x128xf32>
    %30 = math.exp %29 : vector<1x128xf32>
    %31 = arith.addf %16, %18 : vector<1x128xf32>
    %32 = arith.addf %31, %20 : vector<1x128xf32>
    %33 = arith.addf %32, %22 : vector<1x128xf32>
    %34 = arith.addf %33, %24 : vector<1x128xf32>
    %35 = arith.addf %34, %26 : vector<1x128xf32>
    %36 = arith.addf %35, %28 : vector<1x128xf32>
    %37 = arith.addf %36, %30 : vector<1x128xf32>
    %cst = arith.constant 1.000000e+00 : f32
    %38 = vector.broadcast %cst : f32 to vector<1x128xf32>
    %39 = arith.divf %38, %37 : vector<1x128xf32>
    %40 = arith.mulf %16, %39 : vector<1x128xf32>
    %41 = arith.mulf %18, %39 : vector<1x128xf32>
    %42 = arith.mulf %20, %39 : vector<1x128xf32>
    %43 = arith.mulf %22, %39 : vector<1x128xf32>
    %44 = arith.mulf %24, %39 : vector<1x128xf32>
    %45 = arith.mulf %26, %39 : vector<1x128xf32>
    %46 = arith.mulf %28, %39 : vector<1x128xf32>
    %47 = arith.mulf %30, %39 : vector<1x128xf32>
    %c0_8 = arith.constant 0 : index
    %c0_9 = arith.constant 0 : index
    %c0_10 = arith.constant 0 : index
    %c0_11 = arith.constant 0 : index
    %48 = vector.load %arg2[%c0_8, %c0_9, %c0_10, %c0_11] : memref<1x8x16x128xf32, #tpu.memory_space<vmem>>, vector<1x1x16x128xf32>
    %49 = vector.shape_cast %48 : vector<1x1x16x128xf32> to vector<16x128xf32>
    %50 = vector.broadcast %40 : vector<1x128xf32> to vector<16x128xf32>
    %51 = arith.mulf %50, %49 : vector<16x128xf32>
    %c0_12 = arith.constant 0 : index
    %c1_13 = arith.constant 1 : index
    %c0_14 = arith.constant 0 : index
    %c0_15 = arith.constant 0 : index
    %52 = vector.load %arg2[%c0_12, %c1_13, %c0_14, %c0_15] : memref<1x8x16x128xf32, #tpu.memory_space<vmem>>, vector<1x1x16x128xf32>
    %53 = vector.shape_cast %52 : vector<1x1x16x128xf32> to vector<16x128xf32>
    %54 = vector.broadcast %41 : vector<1x128xf32> to vector<16x128xf32>
    %55 = arith.mulf %54, %53 : vector<16x128xf32>
    %56 = arith.addf %51, %55 : vector<16x128xf32>
    %c0_16 = arith.constant 0 : index
    %c2_17 = arith.constant 2 : index
    %c0_18 = arith.constant 0 : index
    %c0_19 = arith.constant 0 : index
    %57 = vector.load %arg2[%c0_16, %c2_17, %c0_18, %c0_19] : memref<1x8x16x128xf32, #tpu.memory_space<vmem>>, vector<1x1x16x128xf32>
    %58 = vector.shape_cast %57 : vector<1x1x16x128xf32> to vector<16x128xf32>
    %59 = vector.broadcast %42 : vector<1x128xf32> to vector<16x128xf32>
    %60 = arith.mulf %59, %58 : vector<16x128xf32>
    %61 = arith.addf %56, %60 : vector<16x128xf32>
    %c0_20 = arith.constant 0 : index
    %c3_21 = arith.constant 3 : index
    %c0_22 = arith.constant 0 : index
    %c0_23 = arith.constant 0 : index
    %62 = vector.load %arg2[%c0_20, %c3_21, %c0_22, %c0_23] : memref<1x8x16x128xf32, #tpu.memory_space<vmem>>, vector<1x1x16x128xf32>
    %63 = vector.shape_cast %62 : vector<1x1x16x128xf32> to vector<16x128xf32>
    %64 = vector.broadcast %43 : vector<1x128xf32> to vector<16x128xf32>
    %65 = arith.mulf %64, %63 : vector<16x128xf32>
    %66 = arith.addf %61, %65 : vector<16x128xf32>
    %c0_24 = arith.constant 0 : index
    %c4_25 = arith.constant 4 : index
    %c0_26 = arith.constant 0 : index
    %c0_27 = arith.constant 0 : index
    %67 = vector.load %arg2[%c0_24, %c4_25, %c0_26, %c0_27] : memref<1x8x16x128xf32, #tpu.memory_space<vmem>>, vector<1x1x16x128xf32>
    %68 = vector.shape_cast %67 : vector<1x1x16x128xf32> to vector<16x128xf32>
    %69 = vector.broadcast %44 : vector<1x128xf32> to vector<16x128xf32>
    %70 = arith.mulf %69, %68 : vector<16x128xf32>
    %71 = arith.addf %66, %70 : vector<16x128xf32>
    %c0_28 = arith.constant 0 : index
    %c5_29 = arith.constant 5 : index
    %c0_30 = arith.constant 0 : index
    %c0_31 = arith.constant 0 : index
    %72 = vector.load %arg2[%c0_28, %c5_29, %c0_30, %c0_31] : memref<1x8x16x128xf32, #tpu.memory_space<vmem>>, vector<1x1x16x128xf32>
    %73 = vector.shape_cast %72 : vector<1x1x16x128xf32> to vector<16x128xf32>
    %74 = vector.broadcast %45 : vector<1x128xf32> to vector<16x128xf32>
    %75 = arith.mulf %74, %73 : vector<16x128xf32>
    %76 = arith.addf %71, %75 : vector<16x128xf32>
    %c0_32 = arith.constant 0 : index
    %c6_33 = arith.constant 6 : index
    %c0_34 = arith.constant 0 : index
    %c0_35 = arith.constant 0 : index
    %77 = vector.load %arg2[%c0_32, %c6_33, %c0_34, %c0_35] : memref<1x8x16x128xf32, #tpu.memory_space<vmem>>, vector<1x1x16x128xf32>
    %78 = vector.shape_cast %77 : vector<1x1x16x128xf32> to vector<16x128xf32>
    %79 = vector.broadcast %46 : vector<1x128xf32> to vector<16x128xf32>
    %80 = arith.mulf %79, %78 : vector<16x128xf32>
    %81 = arith.addf %76, %80 : vector<16x128xf32>
    %c0_36 = arith.constant 0 : index
    %c7_37 = arith.constant 7 : index
    %c0_38 = arith.constant 0 : index
    %c0_39 = arith.constant 0 : index
    %82 = vector.load %arg2[%c0_36, %c7_37, %c0_38, %c0_39] : memref<1x8x16x128xf32, #tpu.memory_space<vmem>>, vector<1x1x16x128xf32>
    %83 = vector.shape_cast %82 : vector<1x1x16x128xf32> to vector<16x128xf32>
    %84 = vector.broadcast %47 : vector<1x128xf32> to vector<16x128xf32>
    %85 = arith.mulf %84, %83 : vector<16x128xf32>
    %86 = arith.addf %81, %85 : vector<16x128xf32>
    %87 = arith.mulf %86, %86 : vector<16x128xf32>
    %cst_40 = arith.constant dense<0.000000e+00> : vector<128xf32>
    %88 = vector.multi_reduction <add>, %87, %cst_40 [0] : vector<16x128xf32> to vector<128xf32>
    %89 = vector.shape_cast %88 : vector<128xf32> to vector<1x128xf32>
    %cst_41 = arith.constant 1.000000e+00 : f32
    %90 = vector.broadcast %cst_41 : f32 to vector<1x128xf32>
    %91 = arith.addf %90, %89 : vector<1x128xf32>
    %92 = arith.divf %89, %91 : vector<1x128xf32>
    %cst_42 = arith.constant 1.000000e-07 : f32
    %93 = vector.broadcast %cst_42 : f32 to vector<1x128xf32>
    %94 = arith.addf %89, %93 : vector<1x128xf32>
    %95 = math.sqrt %94 : vector<1x128xf32>
    %96 = arith.divf %92, %95 : vector<1x128xf32>
    %97 = vector.broadcast %96 : vector<1x128xf32> to vector<16x128xf32>
    %98 = arith.mulf %86, %97 : vector<16x128xf32>
    %c0_43 = arith.constant 0 : index
    %c0_44 = arith.constant 0 : index
    %c0_45 = arith.constant 0 : index
    %c0_46 = arith.constant 0 : index
    %99 = vector.load %arg2[%c0_43, %c0_44, %c0_45, %c0_46] : memref<1x8x16x128xf32, #tpu.memory_space<vmem>>, vector<1x1x16x128xf32>
    %100 = vector.shape_cast %99 : vector<1x1x16x128xf32> to vector<16x128xf32>
    %101 = arith.mulf %100, %98 : vector<16x128xf32>
    %cst_47 = arith.constant dense<0.000000e+00> : vector<128xf32>
    %102 = vector.multi_reduction <add>, %101, %cst_47 [0] : vector<16x128xf32> to vector<128xf32>
    %103 = vector.shape_cast %102 : vector<128xf32> to vector<1x128xf32>
    %104 = arith.addf %0, %103 : vector<1x128xf32>
    %c0_48 = arith.constant 0 : index
    %c1_49 = arith.constant 1 : index
    %c0_50 = arith.constant 0 : index
    %c0_51 = arith.constant 0 : index
    %105 = vector.load %arg2[%c0_48, %c1_49, %c0_50, %c0_51] : memref<1x8x16x128xf32, #tpu.memory_space<vmem>>, vector<1x1x16x128xf32>
    %106 = vector.shape_cast %105 : vector<1x1x16x128xf32> to vector<16x128xf32>
    %107 = arith.mulf %106, %98 : vector<16x128xf32>
    %cst_52 = arith.constant dense<0.000000e+00> : vector<128xf32>
    %108 = vector.multi_reduction <add>, %107, %cst_52 [0] : vector<16x128xf32> to vector<128xf32>
    %109 = vector.shape_cast %108 : vector<128xf32> to vector<1x128xf32>
    %110 = arith.addf %1, %109 : vector<1x128xf32>
    %c0_53 = arith.constant 0 : index
    %c2_54 = arith.constant 2 : index
    %c0_55 = arith.constant 0 : index
    %c0_56 = arith.constant 0 : index
    %111 = vector.load %arg2[%c0_53, %c2_54, %c0_55, %c0_56] : memref<1x8x16x128xf32, #tpu.memory_space<vmem>>, vector<1x1x16x128xf32>
    %112 = vector.shape_cast %111 : vector<1x1x16x128xf32> to vector<16x128xf32>
    %113 = arith.mulf %112, %98 : vector<16x128xf32>
    %cst_57 = arith.constant dense<0.000000e+00> : vector<128xf32>
    %114 = vector.multi_reduction <add>, %113, %cst_57 [0] : vector<16x128xf32> to vector<128xf32>
    %115 = vector.shape_cast %114 : vector<128xf32> to vector<1x128xf32>
    %116 = arith.addf %2, %115 : vector<1x128xf32>
    %c0_58 = arith.constant 0 : index
    %c3_59 = arith.constant 3 : index
    %c0_60 = arith.constant 0 : index
    %c0_61 = arith.constant 0 : index
    %117 = vector.load %arg2[%c0_58, %c3_59, %c0_60, %c0_61] : memref<1x8x16x128xf32, #tpu.memory_space<vmem>>, vector<1x1x16x128xf32>
    %118 = vector.shape_cast %117 : vector<1x1x16x128xf32> to vector<16x128xf32>
    %119 = arith.mulf %118, %98 : vector<16x128xf32>
    %cst_62 = arith.constant dense<0.000000e+00> : vector<128xf32>
    %120 = vector.multi_reduction <add>, %119, %cst_62 [0] : vector<16x128xf32> to vector<128xf32>
    %121 = vector.shape_cast %120 : vector<128xf32> to vector<1x128xf32>
    %122 = arith.addf %3, %121 : vector<1x128xf32>
    %c0_63 = arith.constant 0 : index
    %c4_64 = arith.constant 4 : index
    %c0_65 = arith.constant 0 : index
    %c0_66 = arith.constant 0 : index
    %123 = vector.load %arg2[%c0_63, %c4_64, %c0_65, %c0_66] : memref<1x8x16x128xf32, #tpu.memory_space<vmem>>, vector<1x1x16x128xf32>
    %124 = vector.shape_cast %123 : vector<1x1x16x128xf32> to vector<16x128xf32>
    %125 = arith.mulf %124, %98 : vector<16x128xf32>
    %cst_67 = arith.constant dense<0.000000e+00> : vector<128xf32>
    %126 = vector.multi_reduction <add>, %125, %cst_67 [0] : vector<16x128xf32> to vector<128xf32>
    %127 = vector.shape_cast %126 : vector<128xf32> to vector<1x128xf32>
    %128 = arith.addf %4, %127 : vector<1x128xf32>
    %c0_68 = arith.constant 0 : index
    %c5_69 = arith.constant 5 : index
    %c0_70 = arith.constant 0 : index
    %c0_71 = arith.constant 0 : index
    %129 = vector.load %arg2[%c0_68, %c5_69, %c0_70, %c0_71] : memref<1x8x16x128xf32, #tpu.memory_space<vmem>>, vector<1x1x16x128xf32>
    %130 = vector.shape_cast %129 : vector<1x1x16x128xf32> to vector<16x128xf32>
    %131 = arith.mulf %130, %98 : vector<16x128xf32>
    %cst_72 = arith.constant dense<0.000000e+00> : vector<128xf32>
    %132 = vector.multi_reduction <add>, %131, %cst_72 [0] : vector<16x128xf32> to vector<128xf32>
    %133 = vector.shape_cast %132 : vector<128xf32> to vector<1x128xf32>
    %134 = arith.addf %5, %133 : vector<1x128xf32>
    %c0_73 = arith.constant 0 : index
    %c6_74 = arith.constant 6 : index
    %c0_75 = arith.constant 0 : index
    %c0_76 = arith.constant 0 : index
    %135 = vector.load %arg2[%c0_73, %c6_74, %c0_75, %c0_76] : memref<1x8x16x128xf32, #tpu.memory_space<vmem>>, vector<1x1x16x128xf32>
    %136 = vector.shape_cast %135 : vector<1x1x16x128xf32> to vector<16x128xf32>
    %137 = arith.mulf %136, %98 : vector<16x128xf32>
    %cst_77 = arith.constant dense<0.000000e+00> : vector<128xf32>
    %138 = vector.multi_reduction <add>, %137, %cst_77 [0] : vector<16x128xf32> to vector<128xf32>
    %139 = vector.shape_cast %138 : vector<128xf32> to vector<1x128xf32>
    %140 = arith.addf %6, %139 : vector<1x128xf32>
    %c0_78 = arith.constant 0 : index
    %c7_79 = arith.constant 7 : index
    %c0_80 = arith.constant 0 : index
    %c0_81 = arith.constant 0 : index
    %141 = vector.load %arg2[%c0_78, %c7_79, %c0_80, %c0_81] : memref<1x8x16x128xf32, #tpu.memory_space<vmem>>, vector<1x1x16x128xf32>
    %142 = vector.shape_cast %141 : vector<1x1x16x128xf32> to vector<16x128xf32>
    %143 = arith.mulf %142, %98 : vector<16x128xf32>
    %cst_82 = arith.constant dense<0.000000e+00> : vector<128xf32>
    %144 = vector.multi_reduction <add>, %143, %cst_82 [0] : vector<16x128xf32> to vector<128xf32>
    %145 = vector.shape_cast %144 : vector<128xf32> to vector<1x128xf32>
    %146 = arith.addf %7, %145 : vector<1x128xf32>
    %147 = arith.maximumf %104, %110 : vector<1x128xf32>
    %148 = arith.maximumf %147, %116 : vector<1x128xf32>
    %149 = arith.maximumf %148, %122 : vector<1x128xf32>
    %150 = arith.maximumf %149, %128 : vector<1x128xf32>
    %151 = arith.maximumf %150, %134 : vector<1x128xf32>
    %152 = arith.maximumf %151, %140 : vector<1x128xf32>
    %153 = arith.maximumf %152, %146 : vector<1x128xf32>
    %154 = arith.subf %104, %153 : vector<1x128xf32>
    %155 = math.exp %154 : vector<1x128xf32>
    %156 = arith.subf %110, %153 : vector<1x128xf32>
    %157 = math.exp %156 : vector<1x128xf32>
    %158 = arith.subf %116, %153 : vector<1x128xf32>
    %159 = math.exp %158 : vector<1x128xf32>
    %160 = arith.subf %122, %153 : vector<1x128xf32>
    %161 = math.exp %160 : vector<1x128xf32>
    %162 = arith.subf %128, %153 : vector<1x128xf32>
    %163 = math.exp %162 : vector<1x128xf32>
    %164 = arith.subf %134, %153 : vector<1x128xf32>
    %165 = math.exp %164 : vector<1x128xf32>
    %166 = arith.subf %140, %153 : vector<1x128xf32>
    %167 = math.exp %166 : vector<1x128xf32>
    %168 = arith.subf %146, %153 : vector<1x128xf32>
    %169 = math.exp %168 : vector<1x128xf32>
    %170 = arith.addf %155, %157 : vector<1x128xf32>
    %171 = arith.addf %170, %159 : vector<1x128xf32>
    %172 = arith.addf %171, %161 : vector<1x128xf32>
    %173 = arith.addf %172, %163 : vector<1x128xf32>
    %174 = arith.addf %173, %165 : vector<1x128xf32>
    %175 = arith.addf %174, %167 : vector<1x128xf32>
    %176 = arith.addf %175, %169 : vector<1x128xf32>
    %cst_83 = arith.constant 1.000000e+00 : f32
    %177 = vector.broadcast %cst_83 : f32 to vector<1x128xf32>
    %178 = arith.divf %177, %176 : vector<1x128xf32>
    %179 = arith.mulf %155, %178 : vector<1x128xf32>
    %180 = arith.mulf %157, %178 : vector<1x128xf32>
    %181 = arith.mulf %159, %178 : vector<1x128xf32>
    %182 = arith.mulf %161, %178 : vector<1x128xf32>
    %183 = arith.mulf %163, %178 : vector<1x128xf32>
    %184 = arith.mulf %165, %178 : vector<1x128xf32>
    %185 = arith.mulf %167, %178 : vector<1x128xf32>
    %186 = arith.mulf %169, %178 : vector<1x128xf32>
    %c0_84 = arith.constant 0 : index
    %c0_85 = arith.constant 0 : index
    %c0_86 = arith.constant 0 : index
    %c0_87 = arith.constant 0 : index
    %187 = vector.load %arg2[%c0_84, %c0_85, %c0_86, %c0_87] : memref<1x8x16x128xf32, #tpu.memory_space<vmem>>, vector<1x1x16x128xf32>
    %188 = vector.shape_cast %187 : vector<1x1x16x128xf32> to vector<16x128xf32>
    %189 = vector.broadcast %179 : vector<1x128xf32> to vector<16x128xf32>
    %190 = arith.mulf %189, %188 : vector<16x128xf32>
    %c0_88 = arith.constant 0 : index
    %c1_89 = arith.constant 1 : index
    %c0_90 = arith.constant 0 : index
    %c0_91 = arith.constant 0 : index
    %191 = vector.load %arg2[%c0_88, %c1_89, %c0_90, %c0_91] : memref<1x8x16x128xf32, #tpu.memory_space<vmem>>, vector<1x1x16x128xf32>
    %192 = vector.shape_cast %191 : vector<1x1x16x128xf32> to vector<16x128xf32>
    %193 = vector.broadcast %180 : vector<1x128xf32> to vector<16x128xf32>
    %194 = arith.mulf %193, %192 : vector<16x128xf32>
    %195 = arith.addf %190, %194 : vector<16x128xf32>
    %c0_92 = arith.constant 0 : index
    %c2_93 = arith.constant 2 : index
    %c0_94 = arith.constant 0 : index
    %c0_95 = arith.constant 0 : index
    %196 = vector.load %arg2[%c0_92, %c2_93, %c0_94, %c0_95] : memref<1x8x16x128xf32, #tpu.memory_space<vmem>>, vector<1x1x16x128xf32>
    %197 = vector.shape_cast %196 : vector<1x1x16x128xf32> to vector<16x128xf32>
    %198 = vector.broadcast %181 : vector<1x128xf32> to vector<16x128xf32>
    %199 = arith.mulf %198, %197 : vector<16x128xf32>
    %200 = arith.addf %195, %199 : vector<16x128xf32>
    %c0_96 = arith.constant 0 : index
    %c3_97 = arith.constant 3 : index
    %c0_98 = arith.constant 0 : index
    %c0_99 = arith.constant 0 : index
    %201 = vector.load %arg2[%c0_96, %c3_97, %c0_98, %c0_99] : memref<1x8x16x128xf32, #tpu.memory_space<vmem>>, vector<1x1x16x128xf32>
    %202 = vector.shape_cast %201 : vector<1x1x16x128xf32> to vector<16x128xf32>
    %203 = vector.broadcast %182 : vector<1x128xf32> to vector<16x128xf32>
    %204 = arith.mulf %203, %202 : vector<16x128xf32>
    %205 = arith.addf %200, %204 : vector<16x128xf32>
    %c0_100 = arith.constant 0 : index
    %c4_101 = arith.constant 4 : index
    %c0_102 = arith.constant 0 : index
    %c0_103 = arith.constant 0 : index
    %206 = vector.load %arg2[%c0_100, %c4_101, %c0_102, %c0_103] : memref<1x8x16x128xf32, #tpu.memory_space<vmem>>, vector<1x1x16x128xf32>
    %207 = vector.shape_cast %206 : vector<1x1x16x128xf32> to vector<16x128xf32>
    %208 = vector.broadcast %183 : vector<1x128xf32> to vector<16x128xf32>
    %209 = arith.mulf %208, %207 : vector<16x128xf32>
    %210 = arith.addf %205, %209 : vector<16x128xf32>
    %c0_104 = arith.constant 0 : index
    %c5_105 = arith.constant 5 : index
    %c0_106 = arith.constant 0 : index
    %c0_107 = arith.constant 0 : index
    %211 = vector.load %arg2[%c0_104, %c5_105, %c0_106, %c0_107] : memref<1x8x16x128xf32, #tpu.memory_space<vmem>>, vector<1x1x16x128xf32>
    %212 = vector.shape_cast %211 : vector<1x1x16x128xf32> to vector<16x128xf32>
    %213 = vector.broadcast %184 : vector<1x128xf32> to vector<16x128xf32>
    %214 = arith.mulf %213, %212 : vector<16x128xf32>
    %215 = arith.addf %210, %214 : vector<16x128xf32>
    %c0_108 = arith.constant 0 : index
    %c6_109 = arith.constant 6 : index
    %c0_110 = arith.constant 0 : index
    %c0_111 = arith.constant 0 : index
    %216 = vector.load %arg2[%c0_108, %c6_109, %c0_110, %c0_111] : memref<1x8x16x128xf32, #tpu.memory_space<vmem>>, vector<1x1x16x128xf32>
    %217 = vector.shape_cast %216 : vector<1x1x16x128xf32> to vector<16x128xf32>
    %218 = vector.broadcast %185 : vector<1x128xf32> to vector<16x128xf32>
    %219 = arith.mulf %218, %217 : vector<16x128xf32>
    %220 = arith.addf %215, %219 : vector<16x128xf32>
    %c0_112 = arith.constant 0 : index
    %c7_113 = arith.constant 7 : index
    %c0_114 = arith.constant 0 : index
    %c0_115 = arith.constant 0 : index
    %221 = vector.load %arg2[%c0_112, %c7_113, %c0_114, %c0_115] : memref<1x8x16x128xf32, #tpu.memory_space<vmem>>, vector<1x1x16x128xf32>
    %222 = vector.shape_cast %221 : vector<1x1x16x128xf32> to vector<16x128xf32>
    %223 = vector.broadcast %186 : vector<1x128xf32> to vector<16x128xf32>
    %224 = arith.mulf %223, %222 : vector<16x128xf32>
    %225 = arith.addf %220, %224 : vector<16x128xf32>
    %226 = arith.mulf %225, %225 : vector<16x128xf32>
    %cst_116 = arith.constant dense<0.000000e+00> : vector<128xf32>
    %227 = vector.multi_reduction <add>, %226, %cst_116 [0] : vector<16x128xf32> to vector<128xf32>
    %228 = vector.shape_cast %227 : vector<128xf32> to vector<1x128xf32>
    %cst_117 = arith.constant 1.000000e+00 : f32
    %229 = vector.broadcast %cst_117 : f32 to vector<1x128xf32>
    %230 = arith.addf %229, %228 : vector<1x128xf32>
    %231 = arith.divf %228, %230 : vector<1x128xf32>
    %cst_118 = arith.constant 1.000000e-07 : f32
    %232 = vector.broadcast %cst_118 : f32 to vector<1x128xf32>
    %233 = arith.addf %228, %232 : vector<1x128xf32>
    %234 = math.sqrt %233 : vector<1x128xf32>
    %235 = arith.divf %231, %234 : vector<1x128xf32>
    %236 = vector.broadcast %235 : vector<1x128xf32> to vector<16x128xf32>
    %237 = arith.mulf %225, %236 : vector<16x128xf32>
    %c0_119 = arith.constant 0 : index
    %c0_120 = arith.constant 0 : index
    %c0_121 = arith.constant 0 : index
    %c0_122 = arith.constant 0 : index
    %238 = vector.load %arg2[%c0_119, %c0_120, %c0_121, %c0_122] : memref<1x8x16x128xf32, #tpu.memory_space<vmem>>, vector<1x1x16x128xf32>
    %239 = vector.shape_cast %238 : vector<1x1x16x128xf32> to vector<16x128xf32>
    %240 = arith.mulf %239, %237 : vector<16x128xf32>
    %cst_123 = arith.constant dense<0.000000e+00> : vector<128xf32>
    %241 = vector.multi_reduction <add>, %240, %cst_123 [0] : vector<16x128xf32> to vector<128xf32>
    %242 = vector.shape_cast %241 : vector<128xf32> to vector<1x128xf32>
    %243 = arith.addf %104, %242 : vector<1x128xf32>
    %c0_124 = arith.constant 0 : index
    %c1_125 = arith.constant 1 : index
    %c0_126 = arith.constant 0 : index
    %c0_127 = arith.constant 0 : index
    %244 = vector.load %arg2[%c0_124, %c1_125, %c0_126, %c0_127] : memref<1x8x16x128xf32, #tpu.memory_space<vmem>>, vector<1x1x16x128xf32>
    %245 = vector.shape_cast %244 : vector<1x1x16x128xf32> to vector<16x128xf32>
    %246 = arith.mulf %245, %237 : vector<16x128xf32>
    %cst_128 = arith.constant dense<0.000000e+00> : vector<128xf32>
    %247 = vector.multi_reduction <add>, %246, %cst_128 [0] : vector<16x128xf32> to vector<128xf32>
    %248 = vector.shape_cast %247 : vector<128xf32> to vector<1x128xf32>
    %249 = arith.addf %110, %248 : vector<1x128xf32>
    %c0_129 = arith.constant 0 : index
    %c2_130 = arith.constant 2 : index
    %c0_131 = arith.constant 0 : index
    %c0_132 = arith.constant 0 : index
    %250 = vector.load %arg2[%c0_129, %c2_130, %c0_131, %c0_132] : memref<1x8x16x128xf32, #tpu.memory_space<vmem>>, vector<1x1x16x128xf32>
    %251 = vector.shape_cast %250 : vector<1x1x16x128xf32> to vector<16x128xf32>
    %252 = arith.mulf %251, %237 : vector<16x128xf32>
    %cst_133 = arith.constant dense<0.000000e+00> : vector<128xf32>
    %253 = vector.multi_reduction <add>, %252, %cst_133 [0] : vector<16x128xf32> to vector<128xf32>
    %254 = vector.shape_cast %253 : vector<128xf32> to vector<1x128xf32>
    %255 = arith.addf %116, %254 : vector<1x128xf32>
    %c0_134 = arith.constant 0 : index
    %c3_135 = arith.constant 3 : index
    %c0_136 = arith.constant 0 : index
    %c0_137 = arith.constant 0 : index
    %256 = vector.load %arg2[%c0_134, %c3_135, %c0_136, %c0_137] : memref<1x8x16x128xf32, #tpu.memory_space<vmem>>, vector<1x1x16x128xf32>
    %257 = vector.shape_cast %256 : vector<1x1x16x128xf32> to vector<16x128xf32>
    %258 = arith.mulf %257, %237 : vector<16x128xf32>
    %cst_138 = arith.constant dense<0.000000e+00> : vector<128xf32>
    %259 = vector.multi_reduction <add>, %258, %cst_138 [0] : vector<16x128xf32> to vector<128xf32>
    %260 = vector.shape_cast %259 : vector<128xf32> to vector<1x128xf32>
    %261 = arith.addf %122, %260 : vector<1x128xf32>
    %c0_139 = arith.constant 0 : index
    %c4_140 = arith.constant 4 : index
    %c0_141 = arith.constant 0 : index
    %c0_142 = arith.constant 0 : index
    %262 = vector.load %arg2[%c0_139, %c4_140, %c0_141, %c0_142] : memref<1x8x16x128xf32, #tpu.memory_space<vmem>>, vector<1x1x16x128xf32>
    %263 = vector.shape_cast %262 : vector<1x1x16x128xf32> to vector<16x128xf32>
    %264 = arith.mulf %263, %237 : vector<16x128xf32>
    %cst_143 = arith.constant dense<0.000000e+00> : vector<128xf32>
    %265 = vector.multi_reduction <add>, %264, %cst_143 [0] : vector<16x128xf32> to vector<128xf32>
    %266 = vector.shape_cast %265 : vector<128xf32> to vector<1x128xf32>
    %267 = arith.addf %128, %266 : vector<1x128xf32>
    %c0_144 = arith.constant 0 : index
    %c5_145 = arith.constant 5 : index
    %c0_146 = arith.constant 0 : index
    %c0_147 = arith.constant 0 : index
    %268 = vector.load %arg2[%c0_144, %c5_145, %c0_146, %c0_147] : memref<1x8x16x128xf32, #tpu.memory_space<vmem>>, vector<1x1x16x128xf32>
    %269 = vector.shape_cast %268 : vector<1x1x16x128xf32> to vector<16x128xf32>
    %270 = arith.mulf %269, %237 : vector<16x128xf32>
    %cst_148 = arith.constant dense<0.000000e+00> : vector<128xf32>
    %271 = vector.multi_reduction <add>, %270, %cst_148 [0] : vector<16x128xf32> to vector<128xf32>
    %272 = vector.shape_cast %271 : vector<128xf32> to vector<1x128xf32>
    %273 = arith.addf %134, %272 : vector<1x128xf32>
    %c0_149 = arith.constant 0 : index
    %c6_150 = arith.constant 6 : index
    %c0_151 = arith.constant 0 : index
    %c0_152 = arith.constant 0 : index
    %274 = vector.load %arg2[%c0_149, %c6_150, %c0_151, %c0_152] : memref<1x8x16x128xf32, #tpu.memory_space<vmem>>, vector<1x1x16x128xf32>
    %275 = vector.shape_cast %274 : vector<1x1x16x128xf32> to vector<16x128xf32>
    %276 = arith.mulf %275, %237 : vector<16x128xf32>
    %cst_153 = arith.constant dense<0.000000e+00> : vector<128xf32>
    %277 = vector.multi_reduction <add>, %276, %cst_153 [0] : vector<16x128xf32> to vector<128xf32>
    %278 = vector.shape_cast %277 : vector<128xf32> to vector<1x128xf32>
    %279 = arith.addf %140, %278 : vector<1x128xf32>
    %c0_154 = arith.constant 0 : index
    %c7_155 = arith.constant 7 : index
    %c0_156 = arith.constant 0 : index
    %c0_157 = arith.constant 0 : index
    %280 = vector.load %arg2[%c0_154, %c7_155, %c0_156, %c0_157] : memref<1x8x16x128xf32, #tpu.memory_space<vmem>>, vector<1x1x16x128xf32>
    %281 = vector.shape_cast %280 : vector<1x1x16x128xf32> to vector<16x128xf32>
    %282 = arith.mulf %281, %237 : vector<16x128xf32>
    %cst_158 = arith.constant dense<0.000000e+00> : vector<128xf32>
    %283 = vector.multi_reduction <add>, %282, %cst_158 [0] : vector<16x128xf32> to vector<128xf32>
    %284 = vector.shape_cast %283 : vector<128xf32> to vector<1x128xf32>
    %285 = arith.addf %146, %284 : vector<1x128xf32>
    %286 = arith.maximumf %243, %249 : vector<1x128xf32>
    %287 = arith.maximumf %286, %255 : vector<1x128xf32>
    %288 = arith.maximumf %287, %261 : vector<1x128xf32>
    %289 = arith.maximumf %288, %267 : vector<1x128xf32>
    %290 = arith.maximumf %289, %273 : vector<1x128xf32>
    %291 = arith.maximumf %290, %279 : vector<1x128xf32>
    %292 = arith.maximumf %291, %285 : vector<1x128xf32>
    %293 = arith.subf %243, %292 : vector<1x128xf32>
    %294 = math.exp %293 : vector<1x128xf32>
    %295 = arith.subf %249, %292 : vector<1x128xf32>
    %296 = math.exp %295 : vector<1x128xf32>
    %297 = arith.subf %255, %292 : vector<1x128xf32>
    %298 = math.exp %297 : vector<1x128xf32>
    %299 = arith.subf %261, %292 : vector<1x128xf32>
    %300 = math.exp %299 : vector<1x128xf32>
    %301 = arith.subf %267, %292 : vector<1x128xf32>
    %302 = math.exp %301 : vector<1x128xf32>
    %303 = arith.subf %273, %292 : vector<1x128xf32>
    %304 = math.exp %303 : vector<1x128xf32>
    %305 = arith.subf %279, %292 : vector<1x128xf32>
    %306 = math.exp %305 : vector<1x128xf32>
    %307 = arith.subf %285, %292 : vector<1x128xf32>
    %308 = math.exp %307 : vector<1x128xf32>
    %309 = arith.addf %294, %296 : vector<1x128xf32>
    %310 = arith.addf %309, %298 : vector<1x128xf32>
    %311 = arith.addf %310, %300 : vector<1x128xf32>
    %312 = arith.addf %311, %302 : vector<1x128xf32>
    %313 = arith.addf %312, %304 : vector<1x128xf32>
    %314 = arith.addf %313, %306 : vector<1x128xf32>
    %315 = arith.addf %314, %308 : vector<1x128xf32>
    %cst_159 = arith.constant 1.000000e+00 : f32
    %316 = vector.broadcast %cst_159 : f32 to vector<1x128xf32>
    %317 = arith.divf %316, %315 : vector<1x128xf32>
    %318 = arith.mulf %294, %317 : vector<1x128xf32>
    %319 = arith.mulf %296, %317 : vector<1x128xf32>
    %320 = arith.mulf %298, %317 : vector<1x128xf32>
    %321 = arith.mulf %300, %317 : vector<1x128xf32>
    %322 = arith.mulf %302, %317 : vector<1x128xf32>
    %323 = arith.mulf %304, %317 : vector<1x128xf32>
    %324 = arith.mulf %306, %317 : vector<1x128xf32>
    %325 = arith.mulf %308, %317 : vector<1x128xf32>
    %c0_160 = arith.constant 0 : index
    %c0_161 = arith.constant 0 : index
    %c0_162 = arith.constant 0 : index
    %c0_163 = arith.constant 0 : index
    %326 = vector.load %arg2[%c0_160, %c0_161, %c0_162, %c0_163] : memref<1x8x16x128xf32, #tpu.memory_space<vmem>>, vector<1x1x16x128xf32>
    %327 = vector.shape_cast %326 : vector<1x1x16x128xf32> to vector<16x128xf32>
    %328 = vector.broadcast %318 : vector<1x128xf32> to vector<16x128xf32>
    %329 = arith.mulf %328, %327 : vector<16x128xf32>
    %c0_164 = arith.constant 0 : index
    %c1_165 = arith.constant 1 : index
    %c0_166 = arith.constant 0 : index
    %c0_167 = arith.constant 0 : index
    %330 = vector.load %arg2[%c0_164, %c1_165, %c0_166, %c0_167] : memref<1x8x16x128xf32, #tpu.memory_space<vmem>>, vector<1x1x16x128xf32>
    %331 = vector.shape_cast %330 : vector<1x1x16x128xf32> to vector<16x128xf32>
    %332 = vector.broadcast %319 : vector<1x128xf32> to vector<16x128xf32>
    %333 = arith.mulf %332, %331 : vector<16x128xf32>
    %334 = arith.addf %329, %333 : vector<16x128xf32>
    %c0_168 = arith.constant 0 : index
    %c2_169 = arith.constant 2 : index
    %c0_170 = arith.constant 0 : index
    %c0_171 = arith.constant 0 : index
    %335 = vector.load %arg2[%c0_168, %c2_169, %c0_170, %c0_171] : memref<1x8x16x128xf32, #tpu.memory_space<vmem>>, vector<1x1x16x128xf32>
    %336 = vector.shape_cast %335 : vector<1x1x16x128xf32> to vector<16x128xf32>
    %337 = vector.broadcast %320 : vector<1x128xf32> to vector<16x128xf32>
    %338 = arith.mulf %337, %336 : vector<16x128xf32>
    %339 = arith.addf %334, %338 : vector<16x128xf32>
    %c0_172 = arith.constant 0 : index
    %c3_173 = arith.constant 3 : index
    %c0_174 = arith.constant 0 : index
    %c0_175 = arith.constant 0 : index
    %340 = vector.load %arg2[%c0_172, %c3_173, %c0_174, %c0_175] : memref<1x8x16x128xf32, #tpu.memory_space<vmem>>, vector<1x1x16x128xf32>
    %341 = vector.shape_cast %340 : vector<1x1x16x128xf32> to vector<16x128xf32>
    %342 = vector.broadcast %321 : vector<1x128xf32> to vector<16x128xf32>
    %343 = arith.mulf %342, %341 : vector<16x128xf32>
    %344 = arith.addf %339, %343 : vector<16x128xf32>
    %c0_176 = arith.constant 0 : index
    %c4_177 = arith.constant 4 : index
    %c0_178 = arith.constant 0 : index
    %c0_179 = arith.constant 0 : index
    %345 = vector.load %arg2[%c0_176, %c4_177, %c0_178, %c0_179] : memref<1x8x16x128xf32, #tpu.memory_space<vmem>>, vector<1x1x16x128xf32>
    %346 = vector.shape_cast %345 : vector<1x1x16x128xf32> to vector<16x128xf32>
    %347 = vector.broadcast %322 : vector<1x128xf32> to vector<16x128xf32>
    %348 = arith.mulf %347, %346 : vector<16x128xf32>
    %349 = arith.addf %344, %348 : vector<16x128xf32>
    %c0_180 = arith.constant 0 : index
    %c5_181 = arith.constant 5 : index
    %c0_182 = arith.constant 0 : index
    %c0_183 = arith.constant 0 : index
    %350 = vector.load %arg2[%c0_180, %c5_181, %c0_182, %c0_183] : memref<1x8x16x128xf32, #tpu.memory_space<vmem>>, vector<1x1x16x128xf32>
    %351 = vector.shape_cast %350 : vector<1x1x16x128xf32> to vector<16x128xf32>
    %352 = vector.broadcast %323 : vector<1x128xf32> to vector<16x128xf32>
    %353 = arith.mulf %352, %351 : vector<16x128xf32>
    %354 = arith.addf %349, %353 : vector<16x128xf32>
    %c0_184 = arith.constant 0 : index
    %c6_185 = arith.constant 6 : index
    %c0_186 = arith.constant 0 : index
    %c0_187 = arith.constant 0 : index
    %355 = vector.load %arg2[%c0_184, %c6_185, %c0_186, %c0_187] : memref<1x8x16x128xf32, #tpu.memory_space<vmem>>, vector<1x1x16x128xf32>
    %356 = vector.shape_cast %355 : vector<1x1x16x128xf32> to vector<16x128xf32>
    %357 = vector.broadcast %324 : vector<1x128xf32> to vector<16x128xf32>
    %358 = arith.mulf %357, %356 : vector<16x128xf32>
    %359 = arith.addf %354, %358 : vector<16x128xf32>
    %c0_188 = arith.constant 0 : index
    %c7_189 = arith.constant 7 : index
    %c0_190 = arith.constant 0 : index
    %c0_191 = arith.constant 0 : index
    %360 = vector.load %arg2[%c0_188, %c7_189, %c0_190, %c0_191] : memref<1x8x16x128xf32, #tpu.memory_space<vmem>>, vector<1x1x16x128xf32>
    %361 = vector.shape_cast %360 : vector<1x1x16x128xf32> to vector<16x128xf32>
    %362 = vector.broadcast %325 : vector<1x128xf32> to vector<16x128xf32>
    %363 = arith.mulf %362, %361 : vector<16x128xf32>
    %364 = arith.addf %359, %363 : vector<16x128xf32>
    %365 = arith.mulf %364, %364 : vector<16x128xf32>
    %cst_192 = arith.constant dense<0.000000e+00> : vector<128xf32>
    %366 = vector.multi_reduction <add>, %365, %cst_192 [0] : vector<16x128xf32> to vector<128xf32>
    %367 = vector.shape_cast %366 : vector<128xf32> to vector<1x128xf32>
    %cst_193 = arith.constant 1.000000e+00 : f32
    %368 = vector.broadcast %cst_193 : f32 to vector<1x128xf32>
    %369 = arith.addf %368, %367 : vector<1x128xf32>
    %370 = arith.divf %367, %369 : vector<1x128xf32>
    %cst_194 = arith.constant 1.000000e-07 : f32
    %371 = vector.broadcast %cst_194 : f32 to vector<1x128xf32>
    %372 = arith.addf %367, %371 : vector<1x128xf32>
    %373 = math.sqrt %372 : vector<1x128xf32>
    %374 = arith.divf %370, %373 : vector<1x128xf32>
    %375 = vector.broadcast %374 : vector<1x128xf32> to vector<16x128xf32>
    %376 = arith.mulf %364, %375 : vector<16x128xf32>
    %c0_195 = arith.constant 0 : index
    %c0_196 = arith.constant 0 : index
    %c0_197 = arith.constant 0 : index
    %c0_198 = arith.constant 0 : index
    %377 = vector.load %arg2[%c0_195, %c0_196, %c0_197, %c0_198] : memref<1x8x16x128xf32, #tpu.memory_space<vmem>>, vector<1x1x16x128xf32>
    %378 = vector.shape_cast %377 : vector<1x1x16x128xf32> to vector<16x128xf32>
    %379 = arith.mulf %378, %376 : vector<16x128xf32>
    %cst_199 = arith.constant dense<0.000000e+00> : vector<128xf32>
    %380 = vector.multi_reduction <add>, %379, %cst_199 [0] : vector<16x128xf32> to vector<128xf32>
    %381 = vector.shape_cast %380 : vector<128xf32> to vector<1x128xf32>
    %382 = arith.addf %243, %381 : vector<1x128xf32>
    %c0_200 = arith.constant 0 : index
    %c1_201 = arith.constant 1 : index
    %c0_202 = arith.constant 0 : index
    %c0_203 = arith.constant 0 : index
    %383 = vector.load %arg2[%c0_200, %c1_201, %c0_202, %c0_203] : memref<1x8x16x128xf32, #tpu.memory_space<vmem>>, vector<1x1x16x128xf32>
    %384 = vector.shape_cast %383 : vector<1x1x16x128xf32> to vector<16x128xf32>
    %385 = arith.mulf %384, %376 : vector<16x128xf32>
    %cst_204 = arith.constant dense<0.000000e+00> : vector<128xf32>
    %386 = vector.multi_reduction <add>, %385, %cst_204 [0] : vector<16x128xf32> to vector<128xf32>
    %387 = vector.shape_cast %386 : vector<128xf32> to vector<1x128xf32>
    %388 = arith.addf %249, %387 : vector<1x128xf32>
    %c0_205 = arith.constant 0 : index
    %c2_206 = arith.constant 2 : index
    %c0_207 = arith.constant 0 : index
    %c0_208 = arith.constant 0 : index
    %389 = vector.load %arg2[%c0_205, %c2_206, %c0_207, %c0_208] : memref<1x8x16x128xf32, #tpu.memory_space<vmem>>, vector<1x1x16x128xf32>
    %390 = vector.shape_cast %389 : vector<1x1x16x128xf32> to vector<16x128xf32>
    %391 = arith.mulf %390, %376 : vector<16x128xf32>
    %cst_209 = arith.constant dense<0.000000e+00> : vector<128xf32>
    %392 = vector.multi_reduction <add>, %391, %cst_209 [0] : vector<16x128xf32> to vector<128xf32>
    %393 = vector.shape_cast %392 : vector<128xf32> to vector<1x128xf32>
    %394 = arith.addf %255, %393 : vector<1x128xf32>
    %c0_210 = arith.constant 0 : index
    %c3_211 = arith.constant 3 : index
    %c0_212 = arith.constant 0 : index
    %c0_213 = arith.constant 0 : index
    %395 = vector.load %arg2[%c0_210, %c3_211, %c0_212, %c0_213] : memref<1x8x16x128xf32, #tpu.memory_space<vmem>>, vector<1x1x16x128xf32>
    %396 = vector.shape_cast %395 : vector<1x1x16x128xf32> to vector<16x128xf32>
    %397 = arith.mulf %396, %376 : vector<16x128xf32>
    %cst_214 = arith.constant dense<0.000000e+00> : vector<128xf32>
    %398 = vector.multi_reduction <add>, %397, %cst_214 [0] : vector<16x128xf32> to vector<128xf32>
    %399 = vector.shape_cast %398 : vector<128xf32> to vector<1x128xf32>
    %400 = arith.addf %261, %399 : vector<1x128xf32>
    %c0_215 = arith.constant 0 : index
    %c4_216 = arith.constant 4 : index
    %c0_217 = arith.constant 0 : index
    %c0_218 = arith.constant 0 : index
    %401 = vector.load %arg2[%c0_215, %c4_216, %c0_217, %c0_218] : memref<1x8x16x128xf32, #tpu.memory_space<vmem>>, vector<1x1x16x128xf32>
    %402 = vector.shape_cast %401 : vector<1x1x16x128xf32> to vector<16x128xf32>
    %403 = arith.mulf %402, %376 : vector<16x128xf32>
    %cst_219 = arith.constant dense<0.000000e+00> : vector<128xf32>
    %404 = vector.multi_reduction <add>, %403, %cst_219 [0] : vector<16x128xf32> to vector<128xf32>
    %405 = vector.shape_cast %404 : vector<128xf32> to vector<1x128xf32>
    %406 = arith.addf %267, %405 : vector<1x128xf32>
    %c0_220 = arith.constant 0 : index
    %c5_221 = arith.constant 5 : index
    %c0_222 = arith.constant 0 : index
    %c0_223 = arith.constant 0 : index
    %407 = vector.load %arg2[%c0_220, %c5_221, %c0_222, %c0_223] : memref<1x8x16x128xf32, #tpu.memory_space<vmem>>, vector<1x1x16x128xf32>
    %408 = vector.shape_cast %407 : vector<1x1x16x128xf32> to vector<16x128xf32>
    %409 = arith.mulf %408, %376 : vector<16x128xf32>
    %cst_224 = arith.constant dense<0.000000e+00> : vector<128xf32>
    %410 = vector.multi_reduction <add>, %409, %cst_224 [0] : vector<16x128xf32> to vector<128xf32>
    %411 = vector.shape_cast %410 : vector<128xf32> to vector<1x128xf32>
    %412 = arith.addf %273, %411 : vector<1x128xf32>
    %c0_225 = arith.constant 0 : index
    %c6_226 = arith.constant 6 : index
    %c0_227 = arith.constant 0 : index
    %c0_228 = arith.constant 0 : index
    %413 = vector.load %arg2[%c0_225, %c6_226, %c0_227, %c0_228] : memref<1x8x16x128xf32, #tpu.memory_space<vmem>>, vector<1x1x16x128xf32>
    %414 = vector.shape_cast %413 : vector<1x1x16x128xf32> to vector<16x128xf32>
    %415 = arith.mulf %414, %376 : vector<16x128xf32>
    %cst_229 = arith.constant dense<0.000000e+00> : vector<128xf32>
    %416 = vector.multi_reduction <add>, %415, %cst_229 [0] : vector<16x128xf32> to vector<128xf32>
    %417 = vector.shape_cast %416 : vector<128xf32> to vector<1x128xf32>
    %418 = arith.addf %279, %417 : vector<1x128xf32>
    %c0_230 = arith.constant 0 : index
    %c7_231 = arith.constant 7 : index
    %c0_232 = arith.constant 0 : index
    %c0_233 = arith.constant 0 : index
    %419 = vector.load %arg2[%c0_230, %c7_231, %c0_232, %c0_233] : memref<1x8x16x128xf32, #tpu.memory_space<vmem>>, vector<1x1x16x128xf32>
    %420 = vector.shape_cast %419 : vector<1x1x16x128xf32> to vector<16x128xf32>
    %421 = arith.mulf %420, %376 : vector<16x128xf32>
    %cst_234 = arith.constant dense<0.000000e+00> : vector<128xf32>
    %422 = vector.multi_reduction <add>, %421, %cst_234 [0] : vector<16x128xf32> to vector<128xf32>
    %423 = vector.shape_cast %422 : vector<128xf32> to vector<1x128xf32>
    %424 = arith.addf %285, %423 : vector<1x128xf32>
    %425 = arith.maximumf %382, %388 : vector<1x128xf32>
    %426 = arith.maximumf %425, %394 : vector<1x128xf32>
    %427 = arith.maximumf %426, %400 : vector<1x128xf32>
    %428 = arith.maximumf %427, %406 : vector<1x128xf32>
    %429 = arith.maximumf %428, %412 : vector<1x128xf32>
    %430 = arith.maximumf %429, %418 : vector<1x128xf32>
    %431 = arith.maximumf %430, %424 : vector<1x128xf32>
    %432 = arith.subf %382, %431 : vector<1x128xf32>
    %433 = math.exp %432 : vector<1x128xf32>
    %434 = arith.subf %388, %431 : vector<1x128xf32>
    %435 = math.exp %434 : vector<1x128xf32>
    %436 = arith.subf %394, %431 : vector<1x128xf32>
    %437 = math.exp %436 : vector<1x128xf32>
    %438 = arith.subf %400, %431 : vector<1x128xf32>
    %439 = math.exp %438 : vector<1x128xf32>
    %440 = arith.subf %406, %431 : vector<1x128xf32>
    %441 = math.exp %440 : vector<1x128xf32>
    %442 = arith.subf %412, %431 : vector<1x128xf32>
    %443 = math.exp %442 : vector<1x128xf32>
    %444 = arith.subf %418, %431 : vector<1x128xf32>
    %445 = math.exp %444 : vector<1x128xf32>
    %446 = arith.subf %424, %431 : vector<1x128xf32>
    %447 = math.exp %446 : vector<1x128xf32>
    %448 = arith.addf %433, %435 : vector<1x128xf32>
    %449 = arith.addf %448, %437 : vector<1x128xf32>
    %450 = arith.addf %449, %439 : vector<1x128xf32>
    %451 = arith.addf %450, %441 : vector<1x128xf32>
    %452 = arith.addf %451, %443 : vector<1x128xf32>
    %453 = arith.addf %452, %445 : vector<1x128xf32>
    %454 = arith.addf %453, %447 : vector<1x128xf32>
    %cst_235 = arith.constant 1.000000e+00 : f32
    %455 = vector.broadcast %cst_235 : f32 to vector<1x128xf32>
    %456 = arith.divf %455, %454 : vector<1x128xf32>
    %457 = arith.mulf %433, %456 : vector<1x128xf32>
    %458 = arith.mulf %435, %456 : vector<1x128xf32>
    %459 = arith.mulf %437, %456 : vector<1x128xf32>
    %460 = arith.mulf %439, %456 : vector<1x128xf32>
    %461 = arith.mulf %441, %456 : vector<1x128xf32>
    %462 = arith.mulf %443, %456 : vector<1x128xf32>
    %463 = arith.mulf %445, %456 : vector<1x128xf32>
    %464 = arith.mulf %447, %456 : vector<1x128xf32>
    %c0_236 = arith.constant 0 : index
    %c0_237 = arith.constant 0 : index
    %c0_238 = arith.constant 0 : index
    %c0_239 = arith.constant 0 : index
    %465 = vector.load %arg2[%c0_236, %c0_237, %c0_238, %c0_239] : memref<1x8x16x128xf32, #tpu.memory_space<vmem>>, vector<1x1x16x128xf32>
    %466 = vector.shape_cast %465 : vector<1x1x16x128xf32> to vector<16x128xf32>
    %467 = vector.broadcast %457 : vector<1x128xf32> to vector<16x128xf32>
    %468 = arith.mulf %467, %466 : vector<16x128xf32>
    %c0_240 = arith.constant 0 : index
    %c1_241 = arith.constant 1 : index
    %c0_242 = arith.constant 0 : index
    %c0_243 = arith.constant 0 : index
    %469 = vector.load %arg2[%c0_240, %c1_241, %c0_242, %c0_243] : memref<1x8x16x128xf32, #tpu.memory_space<vmem>>, vector<1x1x16x128xf32>
    %470 = vector.shape_cast %469 : vector<1x1x16x128xf32> to vector<16x128xf32>
    %471 = vector.broadcast %458 : vector<1x128xf32> to vector<16x128xf32>
    %472 = arith.mulf %471, %470 : vector<16x128xf32>
    %473 = arith.addf %468, %472 : vector<16x128xf32>
    %c0_244 = arith.constant 0 : index
    %c2_245 = arith.constant 2 : index
    %c0_246 = arith.constant 0 : index
    %c0_247 = arith.constant 0 : index
    %474 = vector.load %arg2[%c0_244, %c2_245, %c0_246, %c0_247] : memref<1x8x16x128xf32, #tpu.memory_space<vmem>>, vector<1x1x16x128xf32>
    %475 = vector.shape_cast %474 : vector<1x1x16x128xf32> to vector<16x128xf32>
    %476 = vector.broadcast %459 : vector<1x128xf32> to vector<16x128xf32>
    %477 = arith.mulf %476, %475 : vector<16x128xf32>
    %478 = arith.addf %473, %477 : vector<16x128xf32>
    %c0_248 = arith.constant 0 : index
    %c3_249 = arith.constant 3 : index
    %c0_250 = arith.constant 0 : index
    %c0_251 = arith.constant 0 : index
    %479 = vector.load %arg2[%c0_248, %c3_249, %c0_250, %c0_251] : memref<1x8x16x128xf32, #tpu.memory_space<vmem>>, vector<1x1x16x128xf32>
    %480 = vector.shape_cast %479 : vector<1x1x16x128xf32> to vector<16x128xf32>
    %481 = vector.broadcast %460 : vector<1x128xf32> to vector<16x128xf32>
    %482 = arith.mulf %481, %480 : vector<16x128xf32>
    %483 = arith.addf %478, %482 : vector<16x128xf32>
    %c0_252 = arith.constant 0 : index
    %c4_253 = arith.constant 4 : index
    %c0_254 = arith.constant 0 : index
    %c0_255 = arith.constant 0 : index
    %484 = vector.load %arg2[%c0_252, %c4_253, %c0_254, %c0_255] : memref<1x8x16x128xf32, #tpu.memory_space<vmem>>, vector<1x1x16x128xf32>
    %485 = vector.shape_cast %484 : vector<1x1x16x128xf32> to vector<16x128xf32>
    %486 = vector.broadcast %461 : vector<1x128xf32> to vector<16x128xf32>
    %487 = arith.mulf %486, %485 : vector<16x128xf32>
    %488 = arith.addf %483, %487 : vector<16x128xf32>
    %c0_256 = arith.constant 0 : index
    %c5_257 = arith.constant 5 : index
    %c0_258 = arith.constant 0 : index
    %c0_259 = arith.constant 0 : index
    %489 = vector.load %arg2[%c0_256, %c5_257, %c0_258, %c0_259] : memref<1x8x16x128xf32, #tpu.memory_space<vmem>>, vector<1x1x16x128xf32>
    %490 = vector.shape_cast %489 : vector<1x1x16x128xf32> to vector<16x128xf32>
    %491 = vector.broadcast %462 : vector<1x128xf32> to vector<16x128xf32>
    %492 = arith.mulf %491, %490 : vector<16x128xf32>
    %493 = arith.addf %488, %492 : vector<16x128xf32>
    %c0_260 = arith.constant 0 : index
    %c6_261 = arith.constant 6 : index
    %c0_262 = arith.constant 0 : index
    %c0_263 = arith.constant 0 : index
    %494 = vector.load %arg2[%c0_260, %c6_261, %c0_262, %c0_263] : memref<1x8x16x128xf32, #tpu.memory_space<vmem>>, vector<1x1x16x128xf32>
    %495 = vector.shape_cast %494 : vector<1x1x16x128xf32> to vector<16x128xf32>
    %496 = vector.broadcast %463 : vector<1x128xf32> to vector<16x128xf32>
    %497 = arith.mulf %496, %495 : vector<16x128xf32>
    %498 = arith.addf %493, %497 : vector<16x128xf32>
    %c0_264 = arith.constant 0 : index
    %c7_265 = arith.constant 7 : index
    %c0_266 = arith.constant 0 : index
    %c0_267 = arith.constant 0 : index
    %499 = vector.load %arg2[%c0_264, %c7_265, %c0_266, %c0_267] : memref<1x8x16x128xf32, #tpu.memory_space<vmem>>, vector<1x1x16x128xf32>
    %500 = vector.shape_cast %499 : vector<1x1x16x128xf32> to vector<16x128xf32>
    %501 = vector.broadcast %464 : vector<1x128xf32> to vector<16x128xf32>
    %502 = arith.mulf %501, %500 : vector<16x128xf32>
    %503 = arith.addf %498, %502 : vector<16x128xf32>
    %504 = arith.mulf %503, %503 : vector<16x128xf32>
    %cst_268 = arith.constant dense<0.000000e+00> : vector<128xf32>
    %505 = vector.multi_reduction <add>, %504, %cst_268 [0] : vector<16x128xf32> to vector<128xf32>
    %506 = vector.shape_cast %505 : vector<128xf32> to vector<1x128xf32>
    %cst_269 = arith.constant 1.000000e+00 : f32
    %507 = vector.broadcast %cst_269 : f32 to vector<1x128xf32>
    %508 = arith.addf %507, %506 : vector<1x128xf32>
    %509 = arith.divf %506, %508 : vector<1x128xf32>
    %cst_270 = arith.constant 1.000000e-07 : f32
    %510 = vector.broadcast %cst_270 : f32 to vector<1x128xf32>
    %511 = arith.addf %506, %510 : vector<1x128xf32>
    %512 = math.sqrt %511 : vector<1x128xf32>
    %513 = arith.divf %509, %512 : vector<1x128xf32>
    %514 = vector.broadcast %513 : vector<1x128xf32> to vector<16x128xf32>
    %515 = arith.mulf %503, %514 : vector<16x128xf32>
    %c0_271 = arith.constant 0 : index
    %c0_272 = arith.constant 0 : index
    %c0_273 = arith.constant 0 : index
    %516 = vector.load %arg4[%c0_271, %c0_272, %c0_273] : memref<1x16x128xf32, #tpu.memory_space<vmem>>, vector<1x16x128xf32>
    %517 = vector.shape_cast %516 : vector<1x16x128xf32> to vector<16x128xf32>
    %518 = vector.shape_cast %515 : vector<16x128xf32> to vector<1x16x128xf32>
    tpu.vector_store %arg4[%c0_271, %c0_272, %c0_273], %518 {strides = array<i32>} : memref<1x16x128xf32, #tpu.memory_space<vmem>>, vector<1x16x128xf32>,
    return
  }
  func.func @transform_0(%arg0: i32, %arg1: i32) -> (i32, i32, i32, i32) {
    %c0_i32 = arith.constant 0 : i32
    %c0_i32_0 = arith.constant 0 : i32
    %c0_i32_1 = arith.constant 0 : i32
    return %arg1, %c0_i32, %c0_i32_0, %arg0 : i32, i32, i32, i32
  }
  func.func @transform_1(%arg0: i32, %arg1: i32) -> (i32, i32) {
    %c0_i32 = arith.constant 0 : i32
    %c0_i32_0 = arith.constant 0 : i32
    return %c0_i32, %arg0 : i32, i32
  }
  func.func @transform_2(%arg0: i32, %arg1: i32) -> (i32, i32, i32) {
    %c0_i32 = arith.constant 0 : i32
    %c0_i32_0 = arith.constant 0 : i32
    return %arg1, %c0_i32, %arg0 : i32, i32, i32
  }
}

</mosaic_0001>

<llo_original>
// kernel: tpu_custom_call.1
$region0: #{tpu_custom_call.1}
  #allocation0 [shape = 'u32[]', space=smem, size = 0x4, offset = 0x4, fixed_abs, tag = 'smem constant byte address 0x4 - core index']
  #allocation1 [shape = 'u32[144,128]{1,0:T(1,128)}', space=vmem, size = 0x12000, scoped, tag = 'internal scratch']
  %s0 = inlined_call_operand.hbm [shape: f32[2,8,16,128], index: 0, kind: input, shape index: {}]
  %s1 = inlined_call_operand.hbm [shape: f32[8,128], index: 1, kind: input, shape index: {}]
  %s2 = inlined_call_operand.hbm [shape: f32[2,16,128], index: 2, kind: output, shape index: {}]
  %s3 = sld [smem:[#allocation0]]
  $region49: #{tpu_custom_call.1} parent=0
    _
  %s5 = ssub.s32 1, %s3
  %s6 = scalar_select 0, %s5, %s3
  $region1: #{tpu_custom_call.1} parent=0
    #allocation2 [shape = 'u8[131072]{0}', space=vmem, size = 0x20000, scoped, tag = 'input window, operand 0']
    #allocation3 [shape = 's32[2]{0}', space=sflag, size = 0x8, scoped, tag = 'scoped memory for tpu_custom_call.1']
    #allocation4 [shape = 's32[2]{0}', space=sflag, size = 0x8, scoped, tag = 'scoped memory for tpu_custom_call.1']
    #allocation5 [shape = 'u8[4096]{0}', space=vmem, size = 0x1000, scoped, tag = 'input window, operand 1, single buffered']
    #allocation6 [shape = 's32[1]{0}', space=sflag, size = 0x4, scoped, tag = 'scoped memory for tpu_custom_call.1']
    #allocation7 [shape = 'u8[16384]{0}', space=vmem, size = 0x4000, scoped, tag = 'output window, operand 0']
    %7 = vsyncpa [#allocation3], 0
    %s8 = scalar_lea.sflag [#allocation3], 1
    %9 = vsyncpa %s8, 0
    %10 = vsyncpa [#allocation6], 0
    %11 = vsyncpa [#allocation4], 0
    %s12 = scalar_lea.sflag [#allocation4], 1
    %13 = vsyncpa %s12, 0
    loop: start=0, step=1, limit=4
    $region2: #{tpu_custom_call.1} parent=1 // loop_pre_header
      _
    $region3: #{tpu_custom_call.1} parent=1 // loop_header
      %s15 = sphi 0, %s19
      %p16 = scmp.ge.s32.totalorder %s15, 4
      %s22 = sphi 0, %s34
      %s23 = sphi 0, %s30
      %s24 = sphi 0, %s22
      %s25 = sphi 0, %s23
      %s26 = sphi 0, %s24
      %s27 = sphi 0, %s25
      %s39 = sphi 0, %s41
      %s42 = sphi 0, %s39
      %s43 = sphi 0, %s42
      %s59 = sphi 0, %s43
      %s65 = sphi 0, %s67
      %s68 = sphi 0, %s65
      %s69 = sphi 0, %s68
      %s85 = sphi 0, %s69
      %s93 = sphi 0, %s95
      %s96 = sphi 0, %s93
      %s97 = sphi 0, %s96
      %s113 = sphi 0, %s97
    $region4: #{tpu_custom_call.1} parent=1 // loop_header_branch
      %18 = sbr.rel (%p16) target = $region8
    $region5: #{tpu_custom_call.1} parent=1 // loop_body
      %s20 = ssub.s32 %s15, 1
      %s21 = ssub.s32 %s15, 2
      %s28 = sadd.s32 1, %s23
      %p29 = scmp.ge.s32.totalorder %s28, 2
      %s30 = scalar_select %p29, 0, %s28
      %s31 = sadd.s32 1, %s22
      %s32 = scalar_select %p29, %s31, %s22
      %p33 = scmp.ge.s32.totalorder %s32, 1
      %s34 = scalar_select %p33, 0, %s32
      %s35 = ssub.s32 %s23, %s30
      %s36 = ssub.s32 %s22, %s34
      %s37 = sor.u32 %s35, %s36
      %p38 = scmp.eq.s32.totalorder %s37, 0
      %s40 = sadd.s32 %s39, 1
      %s41 = scalar_select %p38, %s39, %s40
      %p44 = pneg %p38
      %p45 = scmp.eq.s32.totalorder %s15, 1
      %p46 = por %p44, %p45
      %p47 = scmp.ne.s32.totalorder %s39, %s42
      %p48 = scmp.eq.s32.totalorder %s15, 0
      %p49 = por %p47, %p48
      %p50 = scmp.ne.s32.totalorder %s39, %s42
      %p51 = scmp.eq.s32.totalorder %s20, 1
      %p52 = por %p50, %p51
      %p53 = scmp.ne.s32.totalorder %s42, %s43
      %p54 = scmp.eq.s32.totalorder %s20, 0
      %p55 = por %p53, %p54
      %p56 = scmp.ne.s32.totalorder %s42, %s43
      %p57 = scmp.eq.s32.totalorder %s21, 1
      %p58 = por %p56, %p57
      %p60 = scmp.ne.s32.totalorder %s43, %s59
      %p61 = scmp.eq.s32.totalorder %s21, 0
      %p62 = por %p60, %p61
      %s63 = ssub.s32 %s22, %s34
      %p64 = scmp.eq.s32.totalorder %s63, 0
      %s66 = sadd.s32 %s65, 1
      %s67 = scalar_select %p64, %s65, %s66
      %p70 = pneg %p64
      %p71 = scmp.eq.s32.totalorder %s15, 1
      %p72 = por %p70, %p71
      %p73 = scmp.ne.s32.totalorder %s65, %s68
      %p74 = scmp.eq.s32.totalorder %s15, 0
      %p75 = por %p73, %p74
      %p76 = scmp.ne.s32.totalorder %s65, %s68
      %p77 = scmp.eq.s32.totalorder %s20, 1
      %p78 = por %p76, %p77
      %p79 = scmp.ne.s32.totalorder %s68, %s69
      %p80 = scmp.eq.s32.totalorder %s20, 0
      %p81 = por %p79, %p80
      %p82 = scmp.ne.s32.totalorder %s68, %s69
      %p83 = scmp.eq.s32.totalorder %s21, 1
      %p84 = por %p82, %p83
      %p86 = scmp.ne.s32.totalorder %s69, %s85
      %p87 = scmp.eq.s32.totalorder %s21, 0
      %p88 = por %p86, %p87
      %s89 = ssub.s32 %s23, %s30
      %s90 = ssub.s32 %s22, %s34
      %s91 = sor.u32 %s89, %s90
      %p92 = scmp.eq.s32.totalorder %s91, 0
      %s94 = sadd.s32 %s93, 1
      %s95 = scalar_select %p92, %s93, %s94
      %p98 = pneg %p92
      %p99 = scmp.eq.s32.totalorder %s15, 1
      %p100 = por %p98, %p99
      %p101 = scmp.ne.s32.totalorder %s93, %s96
      %p102 = scmp.eq.s32.totalorder %s15, 0
      %p103 = por %p101, %p102
      %p104 = scmp.ne.s32.totalorder %s93, %s96
      %p105 = scmp.eq.s32.totalorder %s20, 1
      %p106 = por %p104, %p105
      %p107 = scmp.ne.s32.totalorder %s96, %s97
      %p108 = scmp.eq.s32.totalorder %s20, 0
      %p109 = por %p107, %p108
      %p110 = scmp.ne.s32.totalorder %s96, %s97
      %p111 = scmp.eq.s32.totalorder %s21, 1
      %p112 = por %p110, %p111
      %p114 = scmp.ne.s32.totalorder %s97, %s113
      %p115 = scmp.eq.s32.totalorder %s21, 0
      %p116 = por %p114, %p115
      %p117 = scmp.le.s32.totalorder 1, %s15
      %p118 = scmp.lt.s32.totalorder %s15, 3
      %p119 = pnand %p117, %p118
      %p120 = pneg %p119
      // Predicated region
      $region9: #{tpu_custom_call.1} parent=5 // pred_check
        _
      $region10: #{tpu_custom_call.1} parent=5 // pred_check_branch
        %122 = sbr.rel (%p119) target = $region12
      $region11: #{tpu_custom_call.1} parent=5 // pred_region
        %s123 = ssub.s32 %s15, 1
        // Predicated region
        $region13: #{tpu_custom_call.1} parent=11 // pred_check
          %p124 = pneg %p81
        $region14: #{tpu_custom_call.1} parent=11 // pred_check_branch
          %126 = sbr.rel (%p124) target = $region16
        $region15: #{tpu_custom_call.1} parent=11 // pred_region
          %s128 = ssub.s32 128, 128
          %129 = vsyncadd [#allocation6], %s128
          %s130 = smul.addr %s24, 128
          %s131 = scalar_lea.hbm %s1, %s130
          %s133 = sshll.u32 [#allocation5], 4
          %s134 = int_to_ptr.vmem [resolvable:$true] %s133
          %136 = dma.hbm_to_vmem [thread:$0]  %s131, 128, %s134, [#allocation6]
        $region16: #{tpu_custom_call.1} parent=11 // pred_fallthru
          _
      $region12: #{tpu_custom_call.1} parent=5 // pred_fallthru
        _
      %p137 = scmp.lt.s32.totalorder %s15, 2
      // Predicated region
      $region17: #{tpu_custom_call.1} parent=5 // pred_check
        %p138 = pneg %p137
      $region18: #{tpu_custom_call.1} parent=5 // pred_check_branch
        %140 = sbr.rel (%p138) target = $region20
      $region19: #{tpu_custom_call.1} parent=5 // pred_region
        // Predicated region
        $region21: #{tpu_custom_call.1} parent=19 // pred_check
          %p141 = pneg %p49
        $region22: #{tpu_custom_call.1} parent=19 // pred_check_branch
          %143 = sbr.rel (%p141) target = $region24
        $region23: #{tpu_custom_call.1} parent=19 // pred_region
          %s144 = sand.u32 %s39, 1
          %s145 = scalar_lea.sflag [#allocation3], %s144
          %s146 = sand.u32 %s39, 1
          %s147 = smul.addr %s146, 128
          %s148 = scalar_lea.vmem [#allocation2], %s147
          %s150 = ssub.s32 2048, 2048
          %151 = vsyncadd %s145, %s150
          %s152 = smul.addr %s23, 16
          %s153 = sadd.s32 %s22, %s152
          %s154 = smul.addr %s153, 128
          %s155 = scalar_lea.hbm %s0, %s154
          %s156 = sshll.u32 %s148, 4
          %s157 = int_to_ptr.vmem [resolvable:$true] %s156
          %162 = dma.hbm_to_vmem [thread:$0]  %s155, 2048, %s157, %s145, 128, 128, 8
        $region24: #{tpu_custom_call.1} parent=19 // pred_fallthru
          _
      $region20: #{tpu_custom_call.1} parent=5 // pred_fallthru
        _
      %p163 = scmp.le.s32.totalorder 1, %s15
      %p164 = scmp.lt.s32.totalorder %s15, 3
      %p165 = pnand %p163, %p164
      %p166 = pneg %p165
      // Predicated region
      $region25: #{tpu_custom_call.1} parent=5 // pred_check
        _
      $region26: #{tpu_custom_call.1} parent=5 // pred_check_branch
        %168 = sbr.rel (%p165) target = $region28
      $region27: #{tpu_custom_call.1} parent=5 // pred_region
        %s169 = ssub.s32 %s15, 1
        %s170 = sand.u32 %s42, 1
        %s171 = scalar_lea.sflag [#allocation3], %s170
        %s172 = sand.u32 %s42, 1
        %s173 = smul.addr %s172, 128
        %s174 = scalar_lea.vmem [#allocation2], %s173
        // Predicated region
        $region29: #{tpu_custom_call.1} parent=27 // pred_check
          %p175 = pneg %p55
        $region30: #{tpu_custom_call.1} parent=27 // pred_check_branch
          %177 = sbr.rel (%p175) target = $region32
        $region31: #{tpu_custom_call.1} parent=27 // pred_region
          %178 = dma.done %s171, 2048
        $region32: #{tpu_custom_call.1} parent=27 // pred_fallthru
          _
        // Predicated region
        $region33: #{tpu_custom_call.1} parent=27 // pred_check
          %p179 = pneg %p81
        $region34: #{tpu_custom_call.1} parent=27 // pred_check_branch
          %181 = sbr.rel (%p179) target = $region36
        $region35: #{tpu_custom_call.1} parent=27 // pred_region
          %182 = dma.done [#allocation6], 128
        $region36: #{tpu_custom_call.1} parent=27 // pred_fallthru
          _
        %s183 = sand.u32 %s42, 1
        %s184 = scalar_lea.sflag [#allocation3], %s183
        %s185 = sand.u32 %s42, 1
        %s186 = smul.addr %s185, 128
        %s187 = scalar_lea.vmem [#allocation2], %s186
        %p188 = pneg %p55
        %p189 = pneg %p52
        %p190 = pneg %p81
        %p191 = pneg %p78
        %p192 = pneg %p109
        %p193 = pneg %p106
        %s194 = sand.u32 %s96, 1
        %s195 = scalar_lea.sflag [#allocation4], %s194
        %s196 = sand.u32 %s96, 1
        %s197 = smul.addr %s196, 16
        %s198 = scalar_lea.vmem [#allocation7], %s197
        %v199 = vld [vmem:[#allocation5] sm:$0x1]
        %v200 = vld [vmem:[#allocation5 + $0x1] sm:$0x1]
        %v201 = vld [vmem:[#allocation5 + $0x2] sm:$0x1]
        %v202 = vld [vmem:[#allocation5 + $0x3] sm:$0x1]
        %v203 = vld [vmem:[#allocation5 + $0x4] sm:$0x1]
        %v204 = vld [vmem:[#allocation5 + $0x5] sm:$0x1]
        %v205 = vld [vmem:[#allocation5 + $0x6] sm:$0x1]
        %v206 = vld [vmem:[#allocation5 + $0x7] sm:$0x1]
        %v207 = vmax.f32 %v199, %v200
        %v208 = vmax.f32 %v207, %v201
        %v209 = vmax.f32 %v208, %v202
        %v210 = vmax.f32 %v209, %v203
        %v211 = vmax.f32 %v210, %v204
        %v212 = vmax.f32 %v211, %v205
        %v213 = vmax.f32 %v212, %v206
        %v214 = vsub.f32 %v199, %v213
        %v215 = vmul.f32 %v214, 1.442695
        %v216 = vpow.pop %v215
        %v217 = vsub.f32 %v200, %v213
        %v218 = vmul.f32 %v217, 1.442695
        %v219 = vpow.pop %v218
        %v220 = vsub.f32 %v201, %v213
        %v221 = vmul.f32 %v220, 1.442695
        %v222 = vpow.pop %v221
        %v223 = vsub.f32 %v202, %v213
        %v224 = vmul.f32 %v223, 1.442695
        %v225 = vpow.pop %v224
        %v226 = vsub.f32 %v203, %v213
        %v227 = vmul.f32 %v226, 1.442695
        %v228 = vpow.pop %v227
        %v229 = vsub.f32 %v204, %v213
        %v230 = vmul.f32 %v229, 1.442695
        %v231 = vpow.pop %v230
        %v232 = vsub.f32 %v205, %v213
        %v233 = vmul.f32 %v232, 1.442695
        %v234 = vpow.pop %v233
        %v235 = vsub.f32 %v206, %v213
        %v236 = vmul.f32 %v235, 1.442695
        %v237 = vpow.pop %v236
        %v238 = vadd.f32 %v216, %v219
        %v239 = vadd.f32 %v238, %v222
        %v240 = vadd.f32 %v239, %v225
        %v241 = vadd.f32 %v240, %v228
        %v242 = vadd.f32 %v241, %v231
        %v243 = vadd.f32 %v242, %v234
        %v244 = vadd.f32 %v243, %v237
        %v245 = vrcp.pop %v244
        %v246 = vmul.f32 1.0, %v245
        %v247 = vmul.f32 %v216, %v246
        %v248 = vmul.f32 %v219, %v246
        %v249 = vmul.f32 %v222, %v246
        %v250 = vmul.f32 %v225, %v246
        %v251 = vmul.f32 %v228, %v246
        %v252 = vmul.f32 %v231, %v246
        %v253 = vmul.f32 %v234, %v246
        %v254 = vmul.f32 %v237, %v246
        %v255 = vld [vmem:[%s174] sm:$0xff]
        %v256 = vld [vmem:[%s174 + $0x8] sm:$0xff]
        %v257 = vlaneseq
        %v258 = vshrl.u32 %v257, 7
        %v259 = vsub.s32 0, %v258
        %v260 = vrot.slane %v247, %v259
        %v261 = vmul.f32 %v260, %v255
        %v262 = vmul.f32 %v260, %v256
        %s263 = scalar_lea.vmem %s174, 16 [#allocation2]
        %v264 = vld [vmem:[%s263] sm:$0xff]
        %v265 = vld [vmem:[%s263 + $0x8] sm:$0xff]
        %v266 = vlaneseq
        %v267 = vshrl.u32 %v266, 7
        %v268 = vsub.s32 0, %v267
        %v269 = vrot.slane %v248, %v268
        %v270 = vmul.f32 %v269, %v264
        %v271 = vmul.f32 %v269, %v265
        %v272 = vadd.f32 %v261, %v270
        %v273 = vadd.f32 %v262, %v271
        %s274 = scalar_lea.vmem %s174, 32 [#allocation2]
        %v275 = vld [vmem:[%s274] sm:$0xff]
        %v276 = vld [vmem:[%s274 + $0x8] sm:$0xff]
        %v277 = vlaneseq
        %v278 = vshrl.u32 %v277, 7
        %v279 = vsub.s32 0, %v278
        %v280 = vrot.slane %v249, %v279
        %v281 = vmul.f32 %v280, %v275
        %v282 = vmul.f32 %v280, %v276
        %v283 = vadd.f32 %v272, %v281
        %v284 = vadd.f32 %v273, %v282
        %s285 = scalar_lea.vmem %s174, 48 [#allocation2]
        %v286 = vld [vmem:[%s285] sm:$0xff]
        %v287 = vld [vmem:[%s285 + $0x8] sm:$0xff]
        %v288 = vlaneseq
        %v289 = vshrl.u32 %v288, 7
        %v290 = vsub.s32 0, %v289
        %v291 = vrot.slane %v250, %v290
        %v292 = vmul.f32 %v291, %v286
        %v293 = vmul.f32 %v291, %v287
        %v294 = vadd.f32 %v283, %v292
        %v295 = vadd.f32 %v284, %v293
        %s296 = scalar_lea.vmem %s174, 64 [#allocation2]
        %v297 = vld [vmem:[%s296] sm:$0xff]
        %v298 = vld [vmem:[%s296 + $0x8] sm:$0xff]
        %v299 = vlaneseq
        %v300 = vshrl.u32 %v299, 7
        %v301 = vsub.s32 0, %v300
        %v302 = vrot.slane %v251, %v301
        %v303 = vmul.f32 %v302, %v297
        %v304 = vmul.f32 %v302, %v298
        %v305 = vadd.f32 %v294, %v303
        %v306 = vadd.f32 %v295, %v304
        %s307 = scalar_lea.vmem %s174, 80 [#allocation2]
        %v308 = vld [vmem:[%s307] sm:$0xff]
        %v309 = vld [vmem:[%s307 + $0x8] sm:$0xff]
        %v310 = vlaneseq
        %v311 = vshrl.u32 %v310, 7
        %v312 = vsub.s32 0, %v311
        %v313 = vrot.slane %v252, %v312
        %v314 = vmul.f32 %v313, %v308
        %v315 = vmul.f32 %v313, %v309
        %v316 = vadd.f32 %v305, %v314
        %v317 = vadd.f32 %v306, %v315
        %s318 = scalar_lea.vmem %s174, 96 [#allocation2]
        %v319 = vld [vmem:[%s318] sm:$0xff]
        %v320 = vld [vmem:[%s318 + $0x8] sm:$0xff]
        %v321 = vlaneseq
        %v322 = vshrl.u32 %v321, 7
        %v323 = vsub.s32 0, %v322
        %v324 = vrot.slane %v253, %v323
        %v325 = vmul.f32 %v324, %v319
        %v326 = vmul.f32 %v324, %v320
        %v327 = vadd.f32 %v316, %v325
        %v328 = vadd.f32 %v317, %v326
        %s329 = scalar_lea.vmem %s174, 112 [#allocation2]
        %v330 = vld [vmem:[%s329] sm:$0xff]
        %v331 = vld [vmem:[%s329 + $0x8] sm:$0xff]
        %v332 = vlaneseq
        %v333 = vshrl.u32 %v332, 7
        %v334 = vsub.s32 0, %v333
        %v335 = vrot.slane %v254, %v334
        %v336 = vmul.f32 %v335, %v330
        %v337 = vmul.f32 %v335, %v331
        %v338 = vadd.f32 %v327, %v336
        %v339 = vadd.f32 %v328, %v337
        %v340 = vmul.f32 %v338, %v338
        %v341 = vmul.f32 %v339, %v339
        %v342 = vadd.f32 %v340, %v341
        %v343 = vrot.slane %v342, 4
        %v344 = vadd.f32 %v342, %v343
        %v345 = vrot.slane %v344, 2
        %v346 = vadd.f32 %v344, %v345
        %v347 = vrot.slane %v346, 1
        %v348 = vadd.f32 %v346, %v347
        %v349 = vadd.f32 %v348, 1.0
        %v350 = vrcp.pop %v349
        %v351 = vmul.f32 %v348, %v350
        %v352 = vadd.f32 %v348, 1e-07
        %v353 = vrsqrt.pop %v352
        %v354 = vmul.f32 %v352, %v353
        %vm355 = vcmp.eq.f32.partialorder %v352, inf
        %v356 = vsel %vm355, %v352, %v354
        %vm357 = vcmp.eq.f32.partialorder %v352, 0.0
        %v358 = vand.u32 %v352, 2147483648
        %v359 = vsel %vm357, %v358, %v356
        %v360 = vrcp.pop %v359
        %v361 = vmul.f32 %v351, %v360
        %v362 = vmul.f32 %v338, %v361
        %v363 = vmul.f32 %v339, %v361
        %v364 = vmul.f32 %v255, %v362
        %v365 = vmul.f32 %v256, %v363
        %v366 = vadd.f32 %v364, %v365
        %v367 = vrot.slane %v366, 4
        %v368 = vadd.f32 %v366, %v367
        %v369 = vrot.slane %v368, 2
        %v370 = vadd.f32 %v368, %v369
        %v371 = vrot.slane %v370, 1
        %v372 = vadd.f32 %v370, %v371
        %v373 = vadd.f32 %v199, %v372
        %v374 = vmul.f32 %v264, %v362
        %v375 = vmul.f32 %v265, %v363
        %v376 = vadd.f32 %v374, %v375
        %v377 = vrot.slane %v376, 4
        %v378 = vadd.f32 %v376, %v377
        %v379 = vrot.slane %v378, 2
        %v380 = vadd.f32 %v378, %v379
        %v381 = vrot.slane %v380, 1
        %v382 = vadd.f32 %v380, %v381
        %v383 = vadd.f32 %v200, %v382
        %v384 = vmul.f32 %v275, %v362
        %v385 = vmul.f32 %v276, %v363
        %v386 = vadd.f32 %v384, %v385
        %v387 = vrot.slane %v386, 4
        %v388 = vadd.f32 %v386, %v387
        %v389 = vrot.slane %v388, 2
        %v390 = vadd.f32 %v388, %v389
        %v391 = vrot.slane %v390, 1
        %v392 = vadd.f32 %v390, %v391
        %v393 = vadd.f32 %v201, %v392
        %v394 = vmul.f32 %v286, %v362
        %v395 = vmul.f32 %v287, %v363
        %v396 = vadd.f32 %v394, %v395
        %v397 = vrot.slane %v396, 4
        %v398 = vadd.f32 %v396, %v397
        %v399 = vrot.slane %v398, 2
        %v400 = vadd.f32 %v398, %v399
        %v401 = vrot.slane %v400, 1
        %v402 = vadd.f32 %v400, %v401
        %v403 = vadd.f32 %v202, %v402
        %v404 = vmul.f32 %v297, %v362
        %v405 = vmul.f32 %v298, %v363
        %v406 = vadd.f32 %v404, %v405
        %v407 = vrot.slane %v406, 4
        %v408 = vadd.f32 %v406, %v407
        %v409 = vrot.slane %v408, 2
        %v410 = vadd.f32 %v408, %v409
        %v411 = vrot.slane %v410, 1
        %v412 = vadd.f32 %v410, %v411
        %v413 = vadd.f32 %v203, %v412
        %v414 = vmul.f32 %v308, %v362
        %v415 = vmul.f32 %v309, %v363
        %v416 = vadd.f32 %v414, %v415
        %v417 = vrot.slane %v416, 4
        %v418 = vadd.f32 %v416, %v417
        %v419 = vrot.slane %v418, 2
        %v420 = vadd.f32 %v418, %v419
        %v421 = vrot.slane %v420, 1
        %v422 = vadd.f32 %v420, %v421
        %v423 = vadd.f32 %v204, %v422
        %v424 = vmul.f32 %v319, %v362
        %v425 = vmul.f32 %v320, %v363
        %v426 = vadd.f32 %v424, %v425
        %v427 = vrot.slane %v426, 4
        %v428 = vadd.f32 %v426, %v427
        %v429 = vrot.slane %v428, 2
        %v430 = vadd.f32 %v428, %v429
        %v431 = vrot.slane %v430, 1
        %v432 = vadd.f32 %v430, %v431
        %v433 = vadd.f32 %v205, %v432
        %v434 = vmul.f32 %v330, %v362
        %v435 = vmul.f32 %v331, %v363
        %v436 = vadd.f32 %v434, %v435
        %v437 = vrot.slane %v436, 4
        %v438 = vadd.f32 %v436, %v437
        %v439 = vrot.slane %v438, 2
        %v440 = vadd.f32 %v438, %v439
        %v441 = vrot.slane %v440, 1
        %v442 = vadd.f32 %v440, %v441
        %v443 = vadd.f32 %v206, %v442
        %v444 = vmax.f32 %v373, %v383
        %v445 = vmax.f32 %v444, %v393
        %v446 = vmax.f32 %v445, %v403
        %v447 = vmax.f32 %v446, %v413
        %v448 = vmax.f32 %v447, %v423
        %v449 = vmax.f32 %v448, %v433
        %v450 = vmax.f32 %v449, %v443
        %v451 = vsub.f32 %v373, %v450
        %v452 = vmul.f32 %v451, 1.442695
        %v453 = vpow.pop %v452
        %v454 = vsub.f32 %v383, %v450
        %v455 = vmul.f32 %v454, 1.442695
        %v456 = vpow.pop %v455
        %v457 = vsub.f32 %v393, %v450
        %v458 = vmul.f32 %v457, 1.442695
        %v459 = vpow.pop %v458
        %v460 = vsub.f32 %v403, %v450
        %v461 = vmul.f32 %v460, 1.442695
        %v462 = vpow.pop %v461
        %v463 = vsub.f32 %v413, %v450
        %v464 = vmul.f32 %v463, 1.442695
        %v465 = vpow.pop %v464
        %v466 = vsub.f32 %v423, %v450
        %v467 = vmul.f32 %v466, 1.442695
        %v468 = vpow.pop %v467
        %v469 = vsub.f32 %v433, %v450
        %v470 = vmul.f32 %v469, 1.442695
        %v471 = vpow.pop %v470
        %v472 = vsub.f32 %v443, %v450
        %v473 = vmul.f32 %v472, 1.442695
        %v474 = vpow.pop %v473
        %v475 = vadd.f32 %v453, %v456
        %v476 = vadd.f32 %v475, %v459
        %v477 = vadd.f32 %v476, %v462
        %v478 = vadd.f32 %v477, %v465
        %v479 = vadd.f32 %v478, %v468
        %v480 = vadd.f32 %v479, %v471
        %v481 = vadd.f32 %v480, %v474
        %v482 = vrcp.pop %v481
        %v483 = vmul.f32 1.0, %v482
        %v484 = vmul.f32 %v453, %v483
        %v485 = vmul.f32 %v456, %v483
        %v486 = vmul.f32 %v459, %v483
        %v487 = vmul.f32 %v462, %v483
        %v488 = vmul.f32 %v465, %v483
        %v489 = vmul.f32 %v468, %v483
        %v490 = vmul.f32 %v471, %v483
        %v491 = vmul.f32 %v474, %v483
        %v492 = vlaneseq
        %v493 = vshrl.u32 %v492, 7
        %v494 = vsub.s32 0, %v493
        %v495 = vrot.slane %v484, %v494
        %v496 = vmul.f32 %v495, %v255
        %v497 = vmul.f32 %v495, %v256
        %v498 = vlaneseq
        %v499 = vshrl.u32 %v498, 7
        %v500 = vsub.s32 0, %v499
        %v501 = vrot.slane %v485, %v500
        %v502 = vmul.f32 %v501, %v264
        %v503 = vmul.f32 %v501, %v265
        %v504 = vadd.f32 %v496, %v502
        %v505 = vadd.f32 %v497, %v503
        %v506 = vlaneseq
        %v507 = vshrl.u32 %v506, 7
        %v508 = vsub.s32 0, %v507
        %v509 = vrot.slane %v486, %v508
        %v510 = vmul.f32 %v509, %v275
        %v511 = vmul.f32 %v509, %v276
        %v512 = vadd.f32 %v504, %v510
        %v513 = vadd.f32 %v505, %v511
        %v514 = vlaneseq
        %v515 = vshrl.u32 %v514, 7
        %v516 = vsub.s32 0, %v515
        %v517 = vrot.slane %v487, %v516
        %v518 = vmul.f32 %v517, %v286
        %v519 = vmul.f32 %v517, %v287
        %v520 = vadd.f32 %v512, %v518
        %v521 = vadd.f32 %v513, %v519
        %v522 = vlaneseq
        %v523 = vshrl.u32 %v522, 7
        %v524 = vsub.s32 0, %v523
        %v525 = vrot.slane %v488, %v524
        %v526 = vmul.f32 %v525, %v297
        %v527 = vmul.f32 %v525, %v298
        %v528 = vadd.f32 %v520, %v526
        %v529 = vadd.f32 %v521, %v527
        %v530 = vlaneseq
        %v531 = vshrl.u32 %v530, 7
        %v532 = vsub.s32 0, %v531
        %v533 = vrot.slane %v489, %v532
        %v534 = vmul.f32 %v533, %v308
        %v535 = vmul.f32 %v533, %v309
        %v536 = vadd.f32 %v528, %v534
        %v537 = vadd.f32 %v529, %v535
        %v538 = vlaneseq
        %v539 = vshrl.u32 %v538, 7
        %v540 = vsub.s32 0, %v539
        %v541 = vrot.slane %v490, %v540
        %v542 = vmul.f32 %v541, %v319
        %v543 = vmul.f32 %v541, %v320
        %v544 = vadd.f32 %v536, %v542
        %v545 = vadd.f32 %v537, %v543
        %v546 = vlaneseq
        %v547 = vshrl.u32 %v546, 7
        %v548 = vsub.s32 0, %v547
        %v549 = vrot.slane %v491, %v548
        %v550 = vmul.f32 %v549, %v330
        %v551 = vmul.f32 %v549, %v331
        %v552 = vadd.f32 %v544, %v550
        %v553 = vadd.f32 %v545, %v551
        %v554 = vmul.f32 %v552, %v552
        %v555 = vmul.f32 %v553, %v553
        %v556 = vadd.f32 %v554, %v555
        %v557 = vrot.slane %v556, 4
        %v558 = vadd.f32 %v556, %v557
        %v559 = vrot.slane %v558, 2
        %v560 = vadd.f32 %v558, %v559
        %v561 = vrot.slane %v560, 1
        %v562 = vadd.f32 %v560, %v561
        %v563 = vadd.f32 %v562, 1.0
        %v564 = vrcp.pop %v563
        %v565 = vmul.f32 %v562, %v564
        %v566 = vadd.f32 %v562, 1e-07
        %v567 = vrsqrt.pop %v566
        %v568 = vmul.f32 %v566, %v567
        %vm569 = vcmp.eq.f32.partialorder %v566, inf
        %v570 = vsel %vm569, %v566, %v568
        %vm571 = vcmp.eq.f32.partialorder %v566, 0.0
        %v572 = vand.u32 %v566, 2147483648
        %v573 = vsel %vm571, %v572, %v570
        %v574 = vrcp.pop %v573
        %v575 = vmul.f32 %v565, %v574
        %v576 = vmul.f32 %v552, %v575
        %v577 = vmul.f32 %v553, %v575
        %v578 = vmul.f32 %v255, %v576
        %v579 = vmul.f32 %v256, %v577
        %v580 = vadd.f32 %v578, %v579
        %v581 = vrot.slane %v580, 4
        %v582 = vadd.f32 %v580, %v581
        %v583 = vrot.slane %v582, 2
        %v584 = vadd.f32 %v582, %v583
        %v585 = vrot.slane %v584, 1
        %v586 = vadd.f32 %v584, %v585
        %v587 = vadd.f32 %v373, %v586
        %v588 = vmul.f32 %v264, %v576
        %v589 = vmul.f32 %v265, %v577
        %v590 = vadd.f32 %v588, %v589
        %v591 = vrot.slane %v590, 4
        %v592 = vadd.f32 %v590, %v591
        %v593 = vrot.slane %v592, 2
        %v594 = vadd.f32 %v592, %v593
        %v595 = vrot.slane %v594, 1
        %v596 = vadd.f32 %v594, %v595
        %v597 = vadd.f32 %v383, %v596
        %v598 = vmul.f32 %v275, %v576
        %v599 = vmul.f32 %v276, %v577
        %v600 = vadd.f32 %v598, %v599
        %v601 = vrot.slane %v600, 4
        %v602 = vadd.f32 %v600, %v601
        %v603 = vrot.slane %v602, 2
        %v604 = vadd.f32 %v602, %v603
        %v605 = vrot.slane %v604, 1
        %v606 = vadd.f32 %v604, %v605
        %v607 = vadd.f32 %v393, %v606
        %v608 = vmul.f32 %v286, %v576
        %v609 = vmul.f32 %v287, %v577
        %v610 = vadd.f32 %v608, %v609
        %v611 = vrot.slane %v610, 4
        %v612 = vadd.f32 %v610, %v611
        %v613 = vrot.slane %v612, 2
        %v614 = vadd.f32 %v612, %v613
        %v615 = vrot.slane %v614, 1
        %v616 = vadd.f32 %v614, %v615
        %v617 = vadd.f32 %v403, %v616
        %v618 = vmul.f32 %v297, %v576
        %v619 = vmul.f32 %v298, %v577
        %v620 = vadd.f32 %v618, %v619
        %v621 = vrot.slane %v620, 4
        %v622 = vadd.f32 %v620, %v621
        %v623 = vrot.slane %v622, 2
        %v624 = vadd.f32 %v622, %v623
        %v625 = vrot.slane %v624, 1
        %v626 = vadd.f32 %v624, %v625
        %v627 = vadd.f32 %v413, %v626
        %v628 = vmul.f32 %v308, %v576
        %v629 = vmul.f32 %v309, %v577
        %v630 = vadd.f32 %v628, %v629
        %v631 = vrot.slane %v630, 4
        %v632 = vadd.f32 %v630, %v631
        %v633 = vrot.slane %v632, 2
        %v634 = vadd.f32 %v632, %v633
        %v635 = vrot.slane %v634, 1
        %v636 = vadd.f32 %v634, %v635
        %v637 = vadd.f32 %v423, %v636
        %v638 = vmul.f32 %v319, %v576
        %v639 = vmul.f32 %v320, %v577
        %v640 = vadd.f32 %v638, %v639
        %v641 = vrot.slane %v640, 4
        %v642 = vadd.f32 %v640, %v641
        %v643 = vrot.slane %v642, 2
        %v644 = vadd.f32 %v642, %v643
        %v645 = vrot.slane %v644, 1
        %v646 = vadd.f32 %v644, %v645
        %v647 = vadd.f32 %v433, %v646
        %v648 = vmul.f32 %v330, %v576
        %v649 = vmul.f32 %v331, %v577
        %v650 = vadd.f32 %v648, %v649
        %v651 = vrot.slane %v650, 4
        %v652 = vadd.f32 %v650, %v651
        %v653 = vrot.slane %v652, 2
        %v654 = vadd.f32 %v652, %v653
        %v655 = vrot.slane %v654, 1
        %v656 = vadd.f32 %v654, %v655
        %v657 = vadd.f32 %v443, %v656
        %v658 = vmax.f32 %v587, %v597
        %v659 = vmax.f32 %v658, %v607
        %v660 = vmax.f32 %v659, %v617
        %v661 = vmax.f32 %v660, %v627
        %v662 = vmax.f32 %v661, %v637
        %v663 = vmax.f32 %v662, %v647
        %v664 = vmax.f32 %v663, %v657
        %v665 = vsub.f32 %v587, %v664
        %v666 = vmul.f32 %v665, 1.442695
        %v667 = vpow.pop %v666
        %v668 = vsub.f32 %v597, %v664
        %v669 = vmul.f32 %v668, 1.442695
        %v670 = vpow.pop %v669
        %v671 = vsub.f32 %v607, %v664
        %v672 = vmul.f32 %v671, 1.442695
        %v673 = vpow.pop %v672
        %v674 = vsub.f32 %v617, %v664
        %v675 = vmul.f32 %v674, 1.442695
        %v676 = vpow.pop %v675
        %v677 = vsub.f32 %v627, %v664
        %v678 = vmul.f32 %v677, 1.442695
        %v679 = vpow.pop %v678
        %v680 = vsub.f32 %v637, %v664
        %v681 = vmul.f32 %v680, 1.442695
        %v682 = vpow.pop %v681
        %v683 = vsub.f32 %v647, %v664
        %v684 = vmul.f32 %v683, 1.442695
        %v685 = vpow.pop %v684
        %v686 = vsub.f32 %v657, %v664
        %v687 = vmul.f32 %v686, 1.442695
        %v688 = vpow.pop %v687
        %v689 = vadd.f32 %v667, %v670
        %v690 = vadd.f32 %v689, %v673
        %v691 = vadd.f32 %v690, %v676
        %v692 = vadd.f32 %v691, %v679
        %v693 = vadd.f32 %v692, %v682
        %v694 = vadd.f32 %v693, %v685
        %v695 = vadd.f32 %v694, %v688
        %v696 = vrcp.pop %v695
        %v697 = vmul.f32 1.0, %v696
        %v698 = vmul.f32 %v667, %v697
        %v699 = vmul.f32 %v670, %v697
        %v700 = vmul.f32 %v673, %v697
        %v701 = vmul.f32 %v676, %v697
        %v702 = vmul.f32 %v679, %v697
        %v703 = vmul.f32 %v682, %v697
        %v704 = vmul.f32 %v685, %v697
        %v705 = vmul.f32 %v688, %v697
        %v706 = vlaneseq
        %v707 = vshrl.u32 %v706, 7
        %v708 = vsub.s32 0, %v707
        %v709 = vrot.slane %v698, %v708
        %v710 = vmul.f32 %v709, %v255
        %v711 = vmul.f32 %v709, %v256
        %v712 = vlaneseq
        %v713 = vshrl.u32 %v712, 7
        %v714 = vsub.s32 0, %v713
        %v715 = vrot.slane %v699, %v714
        %v716 = vmul.f32 %v715, %v264
        %v717 = vmul.f32 %v715, %v265
        %v718 = vadd.f32 %v710, %v716
        %v719 = vadd.f32 %v711, %v717
        %v720 = vlaneseq
        %v721 = vshrl.u32 %v720, 7
        %v722 = vsub.s32 0, %v721
        %v723 = vrot.slane %v700, %v722
        %v724 = vmul.f32 %v723, %v275
        %v725 = vmul.f32 %v723, %v276
        %v726 = vadd.f32 %v718, %v724
        %v727 = vadd.f32 %v719, %v725
        %v728 = vlaneseq
        %v729 = vshrl.u32 %v728, 7
        %v730 = vsub.s32 0, %v729
        %v731 = vrot.slane %v701, %v730
        %v732 = vmul.f32 %v731, %v286
        %v733 = vmul.f32 %v731, %v287
        %v734 = vadd.f32 %v726, %v732
        %v735 = vadd.f32 %v727, %v733
        %v736 = vlaneseq
        %v737 = vshrl.u32 %v736, 7
        %v738 = vsub.s32 0, %v737
        %v739 = vrot.slane %v702, %v738
        %v740 = vmul.f32 %v739, %v297
        %v741 = vmul.f32 %v739, %v298
        %v742 = vadd.f32 %v734, %v740
        %v743 = vadd.f32 %v735, %v741
        %v744 = vlaneseq
        %v745 = vshrl.u32 %v744, 7
        %v746 = vsub.s32 0, %v745
        %v747 = vrot.slane %v703, %v746
        %v748 = vmul.f32 %v747, %v308
        %v749 = vmul.f32 %v747, %v309
        %v750 = vadd.f32 %v742, %v748
        %v751 = vadd.f32 %v743, %v749
        %v752 = vlaneseq
        %v753 = vshrl.u32 %v752, 7
        %v754 = vsub.s32 0, %v753
        %v755 = vrot.slane %v704, %v754
        %v756 = vmul.f32 %v755, %v319
        %v757 = vmul.f32 %v755, %v320
        %v758 = vadd.f32 %v750, %v756
        %v759 = vadd.f32 %v751, %v757
        %v760 = vlaneseq
        %v761 = vshrl.u32 %v760, 7
        %v762 = vsub.s32 0, %v761
        %v763 = vrot.slane %v705, %v762
        %v764 = vmul.f32 %v763, %v330
        %v765 = vmul.f32 %v763, %v331
        %v766 = vadd.f32 %v758, %v764
        %v767 = vadd.f32 %v759, %v765
        %v768 = vmul.f32 %v766, %v766
        %v769 = vmul.f32 %v767, %v767
        %v770 = vadd.f32 %v768, %v769
        %v771 = vrot.slane %v770, 4
        %v772 = vadd.f32 %v770, %v771
        %v773 = vrot.slane %v772, 2
        %v774 = vadd.f32 %v772, %v773
        %v775 = vrot.slane %v774, 1
        %v776 = vadd.f32 %v774, %v775
        %v777 = vadd.f32 %v776, 1.0
        %v778 = vrcp.pop %v777
        %v779 = vmul.f32 %v776, %v778
        %v780 = vadd.f32 %v776, 1e-07
        %v781 = vrsqrt.pop %v780
        %v782 = vmul.f32 %v780, %v781
        %vm783 = vcmp.eq.f32.partialorder %v780, inf
        %v784 = vsel %vm783, %v780, %v782
        %vm785 = vcmp.eq.f32.partialorder %v780, 0.0
        %v786 = vand.u32 %v780, 2147483648
        %v787 = vsel %vm785, %v786, %v784
        %v788 = vrcp.pop %v787
        %v789 = vmul.f32 %v779, %v788
        %v790 = vmul.f32 %v766, %v789
        %v791 = vmul.f32 %v767, %v789
        %v792 = vmul.f32 %v255, %v790
        %v793 = vmul.f32 %v256, %v791
        %v794 = vadd.f32 %v792, %v793
        %v795 = vrot.slane %v794, 4
        %v796 = vadd.f32 %v794, %v795
        %v797 = vrot.slane %v796, 2
        %v798 = vadd.f32 %v796, %v797
        %v799 = vrot.slane %v798, 1
        %v800 = vadd.f32 %v798, %v799
        %v801 = vadd.f32 %v587, %v800
        %v802 = vmul.f32 %v264, %v790
        %v803 = vmul.f32 %v265, %v791
        %v804 = vadd.f32 %v802, %v803
        %v805 = vrot.slane %v804, 4
        %v806 = vadd.f32 %v804, %v805
        %v807 = vrot.slane %v806, 2
        %v808 = vadd.f32 %v806, %v807
        %v809 = vrot.slane %v808, 1
        %v810 = vadd.f32 %v808, %v809
        %v811 = vadd.f32 %v597, %v810
        %v812 = vmul.f32 %v275, %v790
        %v813 = vmul.f32 %v276, %v791
        %v814 = vadd.f32 %v812, %v813
        %v815 = vrot.slane %v814, 4
        %v816 = vadd.f32 %v814, %v815
        %v817 = vrot.slane %v816, 2
        %v818 = vadd.f32 %v816, %v817
        %v819 = vrot.slane %v818, 1
        %v820 = vadd.f32 %v818, %v819
        %v821 = vadd.f32 %v607, %v820
        %v822 = vmul.f32 %v286, %v790
        %v823 = vmul.f32 %v287, %v791
        %v824 = vadd.f32 %v822, %v823
        %v825 = vrot.slane %v824, 4
        %v826 = vadd.f32 %v824, %v825
        %v827 = vrot.slane %v826, 2
        %v828 = vadd.f32 %v826, %v827
        %v829 = vrot.slane %v828, 1
        %v830 = vadd.f32 %v828, %v829
        %v831 = vadd.f32 %v617, %v830
        %v832 = vmul.f32 %v297, %v790
        %v833 = vmul.f32 %v298, %v791
        %v834 = vadd.f32 %v832, %v833
        %v835 = vrot.slane %v834, 4
        %v836 = vadd.f32 %v834, %v835
        %v837 = vrot.slane %v836, 2
        %v838 = vadd.f32 %v836, %v837
        %v839 = vrot.slane %v838, 1
        %v840 = vadd.f32 %v838, %v839
        %v841 = vadd.f32 %v627, %v840
        %v842 = vmul.f32 %v308, %v790
        %v843 = vmul.f32 %v309, %v791
        %v844 = vadd.f32 %v842, %v843
        %v845 = vrot.slane %v844, 4
        %v846 = vadd.f32 %v844, %v845
        %v847 = vrot.slane %v846, 2
        %v848 = vadd.f32 %v846, %v847
        %v849 = vrot.slane %v848, 1
        %v850 = vadd.f32 %v848, %v849
        %v851 = vadd.f32 %v637, %v850
        %v852 = vmul.f32 %v319, %v790
        %v853 = vmul.f32 %v320, %v791
        %v854 = vadd.f32 %v852, %v853
        %v855 = vrot.slane %v854, 4
        %v856 = vadd.f32 %v854, %v855
        %v857 = vrot.slane %v856, 2
        %v858 = vadd.f32 %v856, %v857
        %v859 = vrot.slane %v858, 1
        %v860 = vadd.f32 %v858, %v859
        %v861 = vadd.f32 %v647, %v860
        %v862 = vmul.f32 %v330, %v790
        %v863 = vmul.f32 %v331, %v791
        %v864 = vadd.f32 %v862, %v863
        %v865 = vrot.slane %v864, 4
        %v866 = vadd.f32 %v864, %v865
        %v867 = vrot.slane %v866, 2
        %v868 = vadd.f32 %v866, %v867
        %v869 = vrot.slane %v868, 1
        %v870 = vadd.f32 %v868, %v869
        %v871 = vadd.f32 %v657, %v870
        %v872 = vmax.f32 %v801, %v811
        %v873 = vmax.f32 %v872, %v821
        %v874 = vmax.f32 %v873, %v831
        %v875 = vmax.f32 %v874, %v841
        %v876 = vmax.f32 %v875, %v851
        %v877 = vmax.f32 %v876, %v861
        %v878 = vmax.f32 %v877, %v871
        %v879 = vsub.f32 %v801, %v878
        %v880 = vmul.f32 %v879, 1.442695
        %v881 = vpow.pop %v880
        %v882 = vsub.f32 %v811, %v878
        %v883 = vmul.f32 %v882, 1.442695
        %v884 = vpow.pop %v883
        %v885 = vsub.f32 %v821, %v878
        %v886 = vmul.f32 %v885, 1.442695
        %v887 = vpow.pop %v886
        %v888 = vsub.f32 %v831, %v878
        %v889 = vmul.f32 %v888, 1.442695
        %v890 = vpow.pop %v889
        %v891 = vsub.f32 %v841, %v878
        %v892 = vmul.f32 %v891, 1.442695
        %v893 = vpow.pop %v892
        %v894 = vsub.f32 %v851, %v878
        %v895 = vmul.f32 %v894, 1.442695
        %v896 = vpow.pop %v895
        %v897 = vsub.f32 %v861, %v878
        %v898 = vmul.f32 %v897, 1.442695
        %v899 = vpow.pop %v898
        %v900 = vsub.f32 %v871, %v878
        %v901 = vmul.f32 %v900, 1.442695
        %v902 = vpow.pop %v901
        %v903 = vadd.f32 %v881, %v884
        %v904 = vadd.f32 %v903, %v887
        %v905 = vadd.f32 %v904, %v890
        %v906 = vadd.f32 %v905, %v893
        %v907 = vadd.f32 %v906, %v896
        %v908 = vadd.f32 %v907, %v899
        %v909 = vadd.f32 %v908, %v902
        %v910 = vrcp.pop %v909
        %v911 = vmul.f32 1.0, %v910
        %v912 = vmul.f32 %v881, %v911
        %v913 = vmul.f32 %v884, %v911
        %v914 = vmul.f32 %v887, %v911
        %v915 = vmul.f32 %v890, %v911
        %v916 = vmul.f32 %v893, %v911
        %v917 = vmul.f32 %v896, %v911
        %v918 = vmul.f32 %v899, %v911
        %v919 = vmul.f32 %v902, %v911
        %v920 = vlaneseq
        %v921 = vshrl.u32 %v920, 7
        %v922 = vsub.s32 0, %v921
        %v923 = vrot.slane %v912, %v922
        %v924 = vmul.f32 %v923, %v255
        %v925 = vmul.f32 %v923, %v256
        %v926 = vlaneseq
        %v927 = vshrl.u32 %v926, 7
        %v928 = vsub.s32 0, %v927
        %v929 = vrot.slane %v913, %v928
        %v930 = vmul.f32 %v929, %v264
        %v931 = vmul.f32 %v929, %v265
        %v932 = vadd.f32 %v924, %v930
        %v933 = vadd.f32 %v925, %v931
        %v934 = vlaneseq
        %v935 = vshrl.u32 %v934, 7
        %v936 = vsub.s32 0, %v935
        %v937 = vrot.slane %v914, %v936
        %v938 = vmul.f32 %v937, %v275
        %v939 = vmul.f32 %v937, %v276
        %v940 = vadd.f32 %v932, %v938
        %v941 = vadd.f32 %v933, %v939
        %v942 = vlaneseq
        %v943 = vshrl.u32 %v942, 7
        %v944 = vsub.s32 0, %v943
        %v945 = vrot.slane %v915, %v944
        %v946 = vmul.f32 %v945, %v286
        %v947 = vmul.f32 %v945, %v287
        %v948 = vadd.f32 %v940, %v946
        %v949 = vadd.f32 %v941, %v947
        %v950 = vlaneseq
        %v951 = vshrl.u32 %v950, 7
        %v952 = vsub.s32 0, %v951
        %v953 = vrot.slane %v916, %v952
        %v954 = vmul.f32 %v953, %v297
        %v955 = vmul.f32 %v953, %v298
        %v956 = vadd.f32 %v948, %v954
        %v957 = vadd.f32 %v949, %v955
        %v958 = vlaneseq
        %v959 = vshrl.u32 %v958, 7
        %v960 = vsub.s32 0, %v959
        %v961 = vrot.slane %v917, %v960
        %v962 = vmul.f32 %v961, %v308
        %v963 = vmul.f32 %v961, %v309
        %v964 = vadd.f32 %v956, %v962
        %v965 = vadd.f32 %v957, %v963
        %v966 = vlaneseq
        %v967 = vshrl.u32 %v966, 7
        %v968 = vsub.s32 0, %v967
        %v969 = vrot.slane %v918, %v968
        %v970 = vmul.f32 %v969, %v319
        %v971 = vmul.f32 %v969, %v320
        %v972 = vadd.f32 %v964, %v970
        %v973 = vadd.f32 %v965, %v971
        %v974 = vlaneseq
        %v975 = vshrl.u32 %v974, 7
        %v976 = vsub.s32 0, %v975
        %v977 = vrot.slane %v919, %v976
        %v978 = vmul.f32 %v977, %v330
        %v979 = vmul.f32 %v977, %v331
        %v980 = vadd.f32 %v972, %v978
        %v981 = vadd.f32 %v973, %v979
        %v982 = vmul.f32 %v980, %v980
        %v983 = vmul.f32 %v981, %v981
        %v984 = vadd.f32 %v982, %v983
        %v985 = vrot.slane %v984, 4
        %v986 = vadd.f32 %v984, %v985
        %v987 = vrot.slane %v986, 2
        %v988 = vadd.f32 %v986, %v987
        %v989 = vrot.slane %v988, 1
        %v990 = vadd.f32 %v988, %v989
        %v991 = vadd.f32 %v990, 1.0
        %v992 = vrcp.pop %v991
        %v993 = vmul.f32 %v990, %v992
        %v994 = vadd.f32 %v990, 1e-07
        %v995 = vrsqrt.pop %v994
        %v996 = vmul.f32 %v994, %v995
        %vm997 = vcmp.eq.f32.partialorder %v994, inf
        %v998 = vsel %vm997, %v994, %v996
        %vm999 = vcmp.eq.f32.partialorder %v994, 0.0
        %v1000 = vand.u32 %v994, 2147483648
        %v1001 = vsel %vm999, %v1000, %v998
        %v1002 = vrcp.pop %v1001
        %v1003 = vmul.f32 %v993, %v1002
        %v1004 = vmul.f32 %v980, %v1003
        %v1005 = vmul.f32 %v981, %v1003
        %1006 = vst [vmem:[%s198] sm:$0xff] %v1004
        %1007 = vst [vmem:[%s198 + $0x8] sm:$0xff] %v1005
        %s1008 = sand.u32 %s96, 1
        %s1009 = scalar_lea.sflag [#allocation4], %s1008
        %s1010 = sand.u32 %s96, 1
        %s1011 = smul.addr %s1010, 16
        %s1012 = scalar_lea.vmem [#allocation7], %s1011
        // Predicated region
        $region37: #{tpu_custom_call.1} parent=27 // pred_check
          %p1013 = pneg %p106
        $region38: #{tpu_custom_call.1} parent=27 // pred_check_branch
          %1015 = sbr.rel (%p1013) target = $region40
        $region39: #{tpu_custom_call.1} parent=27 // pred_region
          %s1017 = ssub.s32 256, 256
          %1018 = vsyncadd %s1009, %s1017
          %s1019 = smul.addr %s25, 2
          %s1020 = sadd.s32 %s24, %s1019
          %s1021 = smul.addr %s1020, 128
          %s1022 = scalar_lea.hbm %s2, %s1021
          %s1023 = sshll.u32 %s1012, 4
          %s1024 = int_to_ptr.vmem [resolvable:$true] %s1023
          %1029 = dma.vmem_to_hbm [thread:$0]  %s1024, 256, %s1022, %s1009, 128, 128, 8
        $region40: #{tpu_custom_call.1} parent=27 // pred_fallthru
          _
      $region28: #{tpu_custom_call.1} parent=5 // pred_fallthru
        _
      %p1030 = scmp.le.s32.totalorder 2, %s15
      // Predicated region
      $region41: #{tpu_custom_call.1} parent=5 // pred_check
        %p1031 = pneg %p1030
      $region42: #{tpu_custom_call.1} parent=5 // pred_check_branch
        %1033 = sbr.rel (%p1031) target = $region44
      $region43: #{tpu_custom_call.1} parent=5 // pred_region
        %s1034 = ssub.s32 %s15, 2
        // Predicated region
        $region45: #{tpu_custom_call.1} parent=43 // pred_check
          %p1035 = pneg %p112
        $region46: #{tpu_custom_call.1} parent=43 // pred_check_branch
          %1037 = sbr.rel (%p1035) target = $region48
        $region47: #{tpu_custom_call.1} parent=43 // pred_region
          %s1038 = sand.u32 %s97, 1
          %s1039 = scalar_lea.sflag [#allocation4], %s1038
          %s1040 = sand.u32 %s97, 1
          %s1041 = smul.addr %s1040, 16
          %s1042 = scalar_lea.vmem [#allocation7], %s1041
          %1043 = dma.done %s1039, 256
        $region48: #{tpu_custom_call.1} parent=43 // pred_fallthru
          _
      $region44: #{tpu_custom_call.1} parent=5 // pred_fallthru
        _
    $region6: #{tpu_custom_call.1} parent=1 // loop_footer
      %s19 = sadd.s32 1, %s15
    $region7: #{tpu_custom_call.1} parent=1 // loop_footer_branch
      %14 = sbr.rel target = $region3
    $region8: #{tpu_custom_call.1} parent=1 // loop_exit
      _
    %1044 = vsyncpa [#allocation3], 1
    %s1045 = scalar_lea.sflag [#allocation3], 1
    %1046 = vsyncpa %s1045, 1
    %1047 = vsyncpa [#allocation6], 1
    %1048 = vsyncpa [#allocation4], 1
    %s1049 = scalar_lea.sflag [#allocation4], 1
    %1050 = vsyncpa %s1049, 1

</llo_original>
